<compile_context>
chip_gen: v7x
topology: tpu7x:2x2x1
jax: 0.10.0
libtpu: 0.0.40
codegen_flags: <defaults>
</compile_context>

<pallas_src>
import functools

import jax
import jax.numpy as jnp
from jax import lax
from jax.experimental import pallas as pl
from jax.experimental.pallas import tpu as pltpu


def _sigmoid(x):
    # Exact identity sigmoid(x) = 0.5*(tanh(x/2)+1): single EUP op per element.
    return 0.5 * jnp.tanh(0.5 * x) + 0.5


def _bilstm_kernel(x_ref, xr_ref, wihf_ref, wihb_ref, whh_ref, bf_ref, bb_ref,
                   wef_ref, web_ref, be_ref, out_ref,
                   gx_ref, recf_ref, recb_ref, *, T, Bp):
    H = wihf_ref.shape[1] // 4
    H2 = 2 * H

    # ---- hoisted input projections: two dense MXU passes (no zero MACs) -----
    gxf = jnp.dot(x_ref[...], wihf_ref[...],
                  preferred_element_type=jnp.float32) + bf_ref[...]   # (T*Bp, 4H)
    gxb = jnp.dot(xr_ref[...], wihb_ref[...],
                  preferred_element_type=jnp.float32) + bb_ref[...]   # (T*Bp, 4H)
    # Scatter into gate-major interleaved columns
    # [i_f, i_b, f_f, f_b, g_f, g_b, o_f, o_b]; one-time pass, off the
    # recurrence's serial critical path.
    for k in range(4):
        gx_ref[:, (2 * k) * H:(2 * k + 1) * H] = gxf[:, k * H:(k + 1) * H]
        gx_ref[:, (2 * k + 1) * H:(2 * k + 2) * H] = gxb[:, k * H:(k + 1) * H]

    whh = whh_ref[...]          # (2H, 8H) block-diagonal, hoisted load

    # ---- fused bidirectional recurrence: one h @ W_hh per step ---------------
    def step(t, carry):
        h_cat, c_cat = carry                                   # (Bp, 2H) vreg carries
        row = pl.multiple_of(t * Bp, 8)
        gx_t = gx_ref[pl.ds(row, Bp), :]                       # (Bp, 8H)
        g = jnp.dot(h_cat, whh,
                    preferred_element_type=jnp.float32) + gx_t
        # each gate slice covers [fwd | bwd] as one contiguous (Bp, 2H) block
        i = _sigmoid(g[:, 0:H2])
        f = _sigmoid(g[:, H2:2 * H2])
        gg = jnp.tanh(g[:, 2 * H2:3 * H2])
        o = _sigmoid(g[:, 3 * H2:4 * H2])
        c_new = f * c_cat + i * gg                             # (Bp, 2H)
        h_new = o * jnp.tanh(c_new)                            # (Bp, 2H)
        # hidden-state stashes for the hoisted embedding (off the dependent chain)
        recf_ref[pl.ds(row, Bp), :] = h_new[:, 0:H]
        rrow = pl.multiple_of((T - 1 - t) * Bp, 8)
        recb_ref[pl.ds(rrow, Bp), :] = h_new[:, H:H2]
        return (h_new, c_new)

    h0 = jnp.zeros((Bp, H2), jnp.float32)
    c0 = jnp.zeros((Bp, H2), jnp.float32)
    unroll = True if T <= 8 else 4
    lax.fori_loop(0, T, step, (h0, c0), unroll=unroll)

    # ---- embedding: one matmul pair over all T*Bp rows, lane-dense slab store
    out_ref[...] = (jnp.dot(recf_ref[...], wef_ref[...],
                            preferred_element_type=jnp.float32)
                    + jnp.dot(recb_ref[...], web_ref[...],
                              preferred_element_type=jnp.float32)
                    + be_ref[...]).astype(out_ref.dtype)


def _interleave_gates(wf_t, wb_t, H):
    """Block-diagonal fused recurrent weight (rows_f+rows_b, 8H).

    wf_t/wb_t: (rows, 4H), PyTorch gate order [i|f|g|o] along columns.
    Output column order: [i_f, i_b, f_f, f_b, g_f, g_b, o_f, o_b]; forward
    columns only read the first rows_f input rows, backward columns the rest.
    """
    rows_f, rows_b = wf_t.shape[0], wb_t.shape[0]
    zf = jnp.zeros((rows_f, H), wf_t.dtype)
    zb = jnp.zeros((rows_b, H), wb_t.dtype)
    cols = []
    for k in range(4):
        cols.append(jnp.concatenate([wf_t[:, k * H:(k + 1) * H], zb], axis=0))
        cols.append(jnp.concatenate([zf, wb_t[:, k * H:(k + 1) * H]], axis=0))
    return jnp.concatenate(cols, axis=1)


def _vmem_padded_bytes(shape, itemsize=4):
    """(8,128)-tile padded f32 byte count for a 2-D VMEM buffer."""
    m = shape[0] if len(shape) > 1 else 1
    n = shape[-1]
    m = -(-m // 8) * 8
    n = -(-n // 128) * 128
    return m * n * itemsize


def bidirectional_lstm(x, params):
    """x: (T, B, nIn) f32.  params: PyTorch-shaped weights (see init below)."""
    T, B, nIn = x.shape
    H = params["whh_f"].shape[1]
    nOut = params["w_emb"].shape[0]

    Bp = -(-B // 8) * 8              # pad batch to f32 sublane width
    nOutP = -(-nOut // 128) * 128    # pad output to lane width

    x = x.astype(jnp.float32)
    if Bp != B:
        x = jnp.pad(x, ((0, 0), (0, Bp - B), (0, 0)))
    x_fwd = x.reshape(T * Bp, nIn)
    x_bwd = x[::-1].reshape(T * Bp, nIn)   # time-reversed copy for the bwd direction

    wihf = params["wih_f"].T.astype(jnp.float32)                 # (nIn, 4H)
    wihb = params["wih_b"].T.astype(jnp.float32)                 # (nIn, 4H)
    whh_cat = _interleave_gates(params["whh_f"].T.astype(jnp.float32),
                                params["whh_b"].T.astype(jnp.float32), H)  # (2H, 8H)
    bf = (params["bih_f"] + params["bhh_f"])[None, :].astype(jnp.float32)  # (1, 4H)
    bb = (params["bih_b"] + params["bhh_b"])[None, :].astype(jnp.float32)  # (1, 4H)

    wef = jnp.zeros((H, nOutP), jnp.float32).at[:, :nOut].set(params["w_emb"][:, :H].T)
    web = jnp.zeros((H, nOutP), jnp.float32).at[:, :nOut].set(params["w_emb"][:, H:].T)
    be = jnp.zeros((1, nOutP), jnp.float32).at[0, :nOut].set(params["b_emb"])

    args = (x_fwd, x_bwd, wihf, wihb, whh_cat, bf, bb, wef, web, be)

    scratch_defs = [
        (T * Bp, 8 * H),   # gx: interleaved input-gate pre-activations
        (T * Bp, H),       # forward hidden states (chronological)
        (T * Bp, H),       # backward hidden states (stored in chronological order)
    ]
    scratch_shapes = [pltpu.VMEM(s, jnp.float32) for s in scratch_defs]

    total = sum(_vmem_padded_bytes(a.shape) for a in args)
    total += _vmem_padded_bytes((T * Bp, nOutP))
    total += sum(_vmem_padded_bytes(s) for s in scratch_defs)
    vmem_limit = int(min(64 * 2**20, max(32 * 2**20, 2 * total + (1 << 20))))

    vmem = pl.BlockSpec(memory_space=pltpu.MemorySpace.VMEM)
    out_flat = pl.pallas_call(
        functools.partial(_bilstm_kernel, T=T, Bp=Bp),
        out_shape=jax.ShapeDtypeStruct((T * Bp, nOutP), jnp.float32),
        in_specs=[vmem] * len(args),
        out_specs=vmem,
        scratch_shapes=scratch_shapes,
        compiler_params=pltpu.CompilerParams(vmem_limit_bytes=vmem_limit),
    )(*args)
    return out_flat.reshape(T, Bp, nOutP)[:, :B, :nOut]


def reference(x, p):
    """Pure-JAX reference matching PyTorch nn.LSTM(bidirectional) + Linear."""
    def run_dir(x_seq, wih, whh, bias):
        H = whh.shape[1]
        Bb = x_seq.shape[1]

        def step(carry, x_t):
            h, c = carry
            g = x_t @ wih.T + h @ whh.T + bias
            i, f, gg, o = jnp.split(g, 4, axis=-1)
            c = jax.nn.sigmoid(f) * c + jax.nn.sigmoid(i) * jnp.tanh(gg)
            h = jax.nn.sigmoid(o) * jnp.tanh(c)
            return (h, c), h

        init = (jnp.zeros((Bb, H), jnp.float32), jnp.zeros((Bb, H), jnp.float32))
        _, hs = jax.lax.scan(step, init, x_seq)
        return hs

    hf = run_dir(x, p["wih_f"], p["whh_f"], p["bih_f"] + p["bhh_f"])
    hb = run_dir(x[::-1], p["wih_b"], p["whh_b"], p["bih_b"] + p["bhh_b"])[::-1]
    rec = jnp.concatenate([hf, hb], axis=-1)
    T, B, _ = rec.shape
    out = rec.reshape(T * B, -1) @ p["w_emb"].T + p["b_emb"]
    return out.reshape(T, B, -1)


if __name__ == "__main__":
    T, B, nIn, H, nOut = 8, 2, 16, 32, 16

    key = jax.random.PRNGKey(0)
    ks = jax.random.split(key, 12)
    s_lstm = 1.0 / jnp.sqrt(jnp.float32(H))
    s_emb = 1.0 / jnp.sqrt(jnp.float32(2 * H))

    def u(k, shape, s):
        return jax.random.uniform(k, shape, jnp.float32, -s, s)

    params = {
        # forward direction (PyTorch shapes, gate order [i,f,g,o])
        "wih_f": u(ks[0], (4 * H, nIn), s_lstm),
        "whh_f": u(ks[1], (4 * H, H), s_lstm),
        "bih_f": u(ks[2], (4 * H,), s_lstm),
        "bhh_f": u(ks[3], (4 * H,), s_lstm),
        # reverse direction
        "wih_b": u(ks[4], (4 * H, nIn), s_lstm),
        "whh_b": u(ks[5], (4 * H, H), s_lstm),
        "bih_b": u(ks[6], (4 * H,), s_lstm),
        "bhh_b": u(ks[7], (4 * H,), s_lstm),
        # embedding Linear(2H -> nOut)
        "w_emb": u(ks[8], (nOut, 2 * H), s_emb),
        "b_emb": u(ks[9], (nOut,), s_emb),
    }

    x = jax.random.normal(ks[10], (T, B, nIn), jnp.float32)

    out = bidirectional_lstm(x, params)
    out = jax.block_until_ready(out)

    ref = reference(x, params)
    assert out.shape == (T, B, nOut)
    assert jnp.allclose(out, ref, atol=1e-4, rtol=1e-4), (
        float(jnp.max(jnp.abs(out - ref))))

    print("KERNEL_OK")
</pallas_src>

<mosaic_0001>
module attributes {stable_mosaic.version = 11 : i64} {
  func.func @_bilstm_kernel(%arg0: memref<64x16xf32, #tpu.memory_space<vmem>>, %arg1: memref<64x16xf32, #tpu.memory_space<vmem>>, %arg2: memref<16x128xf32, #tpu.memory_space<vmem>>, %arg3: memref<16x128xf32, #tpu.memory_space<vmem>>, %arg4: memref<64x256xf32, #tpu.memory_space<vmem>>, %arg5: memref<1x128xf32, #tpu.memory_space<vmem>>, %arg6: memref<1x128xf32, #tpu.memory_space<vmem>>, %arg7: memref<32x128xf32, #tpu.memory_space<vmem>>, %arg8: memref<32x128xf32, #tpu.memory_space<vmem>>, %arg9: memref<1x128xf32, #tpu.memory_space<vmem>>, %arg10: memref<64x128xf32, #tpu.memory_space<vmem>>, %arg11: memref<64x256xf32, #tpu.memory_space<vmem>>, %arg12: memref<64x32xf32, #tpu.memory_space<vmem>>, %arg13: memref<64x32xf32, #tpu.memory_space<vmem>>) attributes {dimension_semantics = [], scalar_prefetch = 0 : i64, scratch_operands = 3 : i64, tpu.core_type = #tpu.core_type<tc>} {
    %c0 = arith.constant 0 : index
    %c0_0 = arith.constant 0 : index
    %0 = vector.load %arg0[%c0, %c0_0] : memref<64x16xf32, #tpu.memory_space<vmem>>, vector<64x16xf32>
    %c0_1 = arith.constant 0 : index
    %c0_2 = arith.constant 0 : index
    %1 = vector.load %arg2[%c0_1, %c0_2] : memref<16x128xf32, #tpu.memory_space<vmem>>, vector<16x128xf32>
    %cst = arith.constant dense<0.000000e+00> : vector<64x128xf32>
    %2 = tpu.matmul %0, %1, %cst {dimension_numbers = #tpu.dot_dimension_numbers<[1], [0], [0], [1], [0, 0, 1, 1], [], []>} : vector<64x16xf32>, vector<16x128xf32>, vector<64x128xf32> -> vector<64x128xf32>
    %c0_3 = arith.constant 0 : index
    %c0_4 = arith.constant 0 : index
    %3 = vector.load %arg5[%c0_3, %c0_4] : memref<1x128xf32, #tpu.memory_space<vmem>>, vector<1x128xf32>
    %4 = vector.broadcast %3 : vector<1x128xf32> to vector<64x128xf32>
    %5 = arith.addf %2, %4 : vector<64x128xf32>
    %c0_5 = arith.constant 0 : index
    %c0_6 = arith.constant 0 : index
    %6 = vector.load %arg1[%c0_5, %c0_6] : memref<64x16xf32, #tpu.memory_space<vmem>>, vector<64x16xf32>
    %c0_7 = arith.constant 0 : index
    %c0_8 = arith.constant 0 : index
    %7 = vector.load %arg3[%c0_7, %c0_8] : memref<16x128xf32, #tpu.memory_space<vmem>>, vector<16x128xf32>
    %cst_9 = arith.constant dense<0.000000e+00> : vector<64x128xf32>
    %8 = tpu.matmul %6, %7, %cst_9 {dimension_numbers = #tpu.dot_dimension_numbers<[1], [0], [0], [1], [0, 0, 1, 1], [], []>} : vector<64x16xf32>, vector<16x128xf32>, vector<64x128xf32> -> vector<64x128xf32>
    %c0_10 = arith.constant 0 : index
    %c0_11 = arith.constant 0 : index
    %9 = vector.load %arg6[%c0_10, %c0_11] : memref<1x128xf32, #tpu.memory_space<vmem>>, vector<1x128xf32>
    %10 = vector.broadcast %9 : vector<1x128xf32> to vector<64x128xf32>
    %11 = arith.addf %8, %10 : vector<64x128xf32>
    %12 = vector.extract_strided_slice %5 {offsets = [0, 0], sizes = [64, 32], strides = [1, 1]} : vector<64x128xf32> to vector<64x32xf32>
    %c0_12 = arith.constant 0 : index
    %c0_13 = arith.constant 0 : index
    %13 = vector.load %arg11[%c0_12, %c0_13] : memref<64x256xf32, #tpu.memory_space<vmem>>, vector<64x32xf32>
    tpu.vector_store %arg11[%c0_12, %c0_13], %12 {strides = array<i32>} : memref<64x256xf32, #tpu.memory_space<vmem>>, vector<64x32xf32>,
    %14 = vector.extract_strided_slice %11 {offsets = [0, 0], sizes = [64, 32], strides = [1, 1]} : vector<64x128xf32> to vector<64x32xf32>
    %c0_14 = arith.constant 0 : index
    %c32 = arith.constant 32 : index
    %15 = vector.load %arg11[%c0_14, %c32] : memref<64x256xf32, #tpu.memory_space<vmem>>, vector<64x32xf32>
    tpu.vector_store %arg11[%c0_14, %c32], %14 {strides = array<i32>} : memref<64x256xf32, #tpu.memory_space<vmem>>, vector<64x32xf32>,
    %16 = vector.extract_strided_slice %5 {offsets = [0, 32], sizes = [64, 32], strides = [1, 1]} : vector<64x128xf32> to vector<64x32xf32>
    %c0_15 = arith.constant 0 : index
    %c64 = arith.constant 64 : index
    %17 = vector.load %arg11[%c0_15, %c64] : memref<64x256xf32, #tpu.memory_space<vmem>>, vector<64x32xf32>
    tpu.vector_store %arg11[%c0_15, %c64], %16 {strides = array<i32>} : memref<64x256xf32, #tpu.memory_space<vmem>>, vector<64x32xf32>,
    %18 = vector.extract_strided_slice %11 {offsets = [0, 32], sizes = [64, 32], strides = [1, 1]} : vector<64x128xf32> to vector<64x32xf32>
    %c0_16 = arith.constant 0 : index
    %c96 = arith.constant 96 : index
    %19 = vector.load %arg11[%c0_16, %c96] : memref<64x256xf32, #tpu.memory_space<vmem>>, vector<64x32xf32>
    tpu.vector_store %arg11[%c0_16, %c96], %18 {strides = array<i32>} : memref<64x256xf32, #tpu.memory_space<vmem>>, vector<64x32xf32>,
    %20 = vector.extract_strided_slice %5 {offsets = [0, 64], sizes = [64, 32], strides = [1, 1]} : vector<64x128xf32> to vector<64x32xf32>
    %c0_17 = arith.constant 0 : index
    %c128 = arith.constant 128 : index
    %21 = vector.load %arg11[%c0_17, %c128] : memref<64x256xf32, #tpu.memory_space<vmem>>, vector<64x32xf32>
    tpu.vector_store %arg11[%c0_17, %c128], %20 {strides = array<i32>} : memref<64x256xf32, #tpu.memory_space<vmem>>, vector<64x32xf32>,
    %22 = vector.extract_strided_slice %11 {offsets = [0, 64], sizes = [64, 32], strides = [1, 1]} : vector<64x128xf32> to vector<64x32xf32>
    %c0_18 = arith.constant 0 : index
    %c160 = arith.constant 160 : index
    %23 = vector.load %arg11[%c0_18, %c160] : memref<64x256xf32, #tpu.memory_space<vmem>>, vector<64x32xf32>
    tpu.vector_store %arg11[%c0_18, %c160], %22 {strides = array<i32>} : memref<64x256xf32, #tpu.memory_space<vmem>>, vector<64x32xf32>,
    %24 = vector.extract_strided_slice %5 {offsets = [0, 96], sizes = [64, 32], strides = [1, 1]} : vector<64x128xf32> to vector<64x32xf32>
    %c0_19 = arith.constant 0 : index
    %c192 = arith.constant 192 : index
    %25 = vector.load %arg11[%c0_19, %c192] : memref<64x256xf32, #tpu.memory_space<vmem>>, vector<64x32xf32>
    tpu.vector_store %arg11[%c0_19, %c192], %24 {strides = array<i32>} : memref<64x256xf32, #tpu.memory_space<vmem>>, vector<64x32xf32>,
    %26 = vector.extract_strided_slice %11 {offsets = [0, 96], sizes = [64, 32], strides = [1, 1]} : vector<64x128xf32> to vector<64x32xf32>
    %c0_20 = arith.constant 0 : index
    %c224 = arith.constant 224 : index
    %27 = vector.load %arg11[%c0_20, %c224] : memref<64x256xf32, #tpu.memory_space<vmem>>, vector<64x32xf32>
    tpu.vector_store %arg11[%c0_20, %c224], %26 {strides = array<i32>} : memref<64x256xf32, #tpu.memory_space<vmem>>, vector<64x32xf32>,
    %c0_21 = arith.constant 0 : index
    %c0_22 = arith.constant 0 : index
    %28 = vector.load %arg4[%c0_21, %c0_22] : memref<64x256xf32, #tpu.memory_space<vmem>>, vector<64x256xf32>
    %cst_23 = arith.constant 0.000000e+00 : f32
    %29 = vector.broadcast %cst_23 : f32 to vector<8x64xf32>
    %cst_24 = arith.constant 0.000000e+00 : f32
    %30 = vector.broadcast %cst_24 : f32 to vector<8x64xf32>
    %c0_i32 = arith.constant 0 : i32
    %c8_i32 = arith.constant 8 : i32
    %31 = arith.muli %c0_i32, %c8_i32 : i32
    %32 = tpu.assume_multiple %31, 8 : i32
    %33 = arith.index_cast %32 : i32 to index
    %c0_25 = arith.constant 0 : index
    %34 = vector.load %arg11[%33, %c0_25] : memref<64x256xf32, #tpu.memory_space<vmem>>, vector<8x256xf32>
    %cst_26 = arith.constant dense<0.000000e+00> : vector<8x256xf32>
    %35 = tpu.matmul %29, %28, %cst_26 {dimension_numbers = #tpu.dot_dimension_numbers<[1], [0], [0], [1], [0, 0, 1, 1], [], []>} : vector<8x64xf32>, vector<64x256xf32>, vector<8x256xf32> -> vector<8x256xf32>
    %36 = arith.addf %35, %34 : vector<8x256xf32>
    %37 = vector.extract_strided_slice %36 {offsets = [0, 0], sizes = [8, 64], strides = [1, 1]} : vector<8x256xf32> to vector<8x64xf32>
    %cst_27 = arith.constant 5.000000e-01 : f32
    %38 = vector.broadcast %cst_27 : f32 to vector<8x64xf32>
    %39 = arith.mulf %38, %37 : vector<8x64xf32>
    %40 = math.tanh %39 : vector<8x64xf32>
    %cst_28 = arith.constant 5.000000e-01 : f32
    %41 = vector.broadcast %cst_28 : f32 to vector<8x64xf32>
    %42 = arith.mulf %41, %40 : vector<8x64xf32>
    %cst_29 = arith.constant 5.000000e-01 : f32
    %43 = vector.broadcast %cst_29 : f32 to vector<8x64xf32>
    %44 = arith.addf %42, %43 : vector<8x64xf32>
    %45 = vector.extract_strided_slice %36 {offsets = [0, 64], sizes = [8, 64], strides = [1, 1]} : vector<8x256xf32> to vector<8x64xf32>
    %cst_30 = arith.constant 5.000000e-01 : f32
    %46 = vector.broadcast %cst_30 : f32 to vector<8x64xf32>
    %47 = arith.mulf %46, %45 : vector<8x64xf32>
    %48 = math.tanh %47 : vector<8x64xf32>
    %cst_31 = arith.constant 5.000000e-01 : f32
    %49 = vector.broadcast %cst_31 : f32 to vector<8x64xf32>
    %50 = arith.mulf %49, %48 : vector<8x64xf32>
    %cst_32 = arith.constant 5.000000e-01 : f32
    %51 = vector.broadcast %cst_32 : f32 to vector<8x64xf32>
    %52 = arith.addf %50, %51 : vector<8x64xf32>
    %53 = vector.extract_strided_slice %36 {offsets = [0, 128], sizes = [8, 64], strides = [1, 1]} : vector<8x256xf32> to vector<8x64xf32>
    %54 = math.tanh %53 : vector<8x64xf32>
    %55 = vector.extract_strided_slice %36 {offsets = [0, 192], sizes = [8, 64], strides = [1, 1]} : vector<8x256xf32> to vector<8x64xf32>
    %cst_33 = arith.constant 5.000000e-01 : f32
    %56 = vector.broadcast %cst_33 : f32 to vector<8x64xf32>
    %57 = arith.mulf %56, %55 : vector<8x64xf32>
    %58 = math.tanh %57 : vector<8x64xf32>
    %cst_34 = arith.constant 5.000000e-01 : f32
    %59 = vector.broadcast %cst_34 : f32 to vector<8x64xf32>
    %60 = arith.mulf %59, %58 : vector<8x64xf32>
    %cst_35 = arith.constant 5.000000e-01 : f32
    %61 = vector.broadcast %cst_35 : f32 to vector<8x64xf32>
    %62 = arith.addf %60, %61 : vector<8x64xf32>
    %63 = arith.mulf %52, %30 : vector<8x64xf32>
    %64 = arith.mulf %44, %54 : vector<8x64xf32>
    %65 = arith.addf %63, %64 : vector<8x64xf32>
    %66 = math.tanh %65 : vector<8x64xf32>
    %67 = arith.mulf %62, %66 : vector<8x64xf32>
    %68 = vector.extract_strided_slice %67 {offsets = [0, 0], sizes = [8, 32], strides = [1, 1]} : vector<8x64xf32> to vector<8x32xf32>
    %69 = arith.index_cast %32 : i32 to index
    %c0_36 = arith.constant 0 : index
    %70 = vector.load %arg12[%69, %c0_36] : memref<64x32xf32, #tpu.memory_space<vmem>>, vector<8x32xf32>
    tpu.vector_store %arg12[%69, %c0_36], %68 {strides = array<i32>} : memref<64x32xf32, #tpu.memory_space<vmem>>, vector<8x32xf32>,
    %c7_i32 = arith.constant 7 : i32
    %71 = arith.subi %c7_i32, %c0_i32 : i32
    %c8_i32_37 = arith.constant 8 : i32
    %72 = arith.muli %71, %c8_i32_37 : i32
    %73 = tpu.assume_multiple %72, 8 : i32
    %74 = vector.extract_strided_slice %67 {offsets = [0, 32], sizes = [8, 32], strides = [1, 1]} : vector<8x64xf32> to vector<8x32xf32>
    %75 = arith.index_cast %73 : i32 to index
    %c0_38 = arith.constant 0 : index
    %76 = vector.load %arg13[%75, %c0_38] : memref<64x32xf32, #tpu.memory_space<vmem>>, vector<8x32xf32>
    tpu.vector_store %arg13[%75, %c0_38], %74 {strides = array<i32>} : memref<64x32xf32, #tpu.memory_space<vmem>>, vector<8x32xf32>,
    %c1_i32 = arith.constant 1 : i32
    %c8_i32_39 = arith.constant 8 : i32
    %77 = arith.muli %c1_i32, %c8_i32_39 : i32
    %78 = tpu.assume_multiple %77, 8 : i32
    %79 = arith.index_cast %78 : i32 to index
    %c0_40 = arith.constant 0 : index
    %80 = vector.load %arg11[%79, %c0_40] : memref<64x256xf32, #tpu.memory_space<vmem>>, vector<8x256xf32>
    %cst_41 = arith.constant dense<0.000000e+00> : vector<8x256xf32>
    %81 = tpu.matmul %67, %28, %cst_41 {dimension_numbers = #tpu.dot_dimension_numbers<[1], [0], [0], [1], [0, 0, 1, 1], [], []>} : vector<8x64xf32>, vector<64x256xf32>, vector<8x256xf32> -> vector<8x256xf32>
    %82 = arith.addf %81, %80 : vector<8x256xf32>
    %83 = vector.extract_strided_slice %82 {offsets = [0, 0], sizes = [8, 64], strides = [1, 1]} : vector<8x256xf32> to vector<8x64xf32>
    %cst_42 = arith.constant 5.000000e-01 : f32
    %84 = vector.broadcast %cst_42 : f32 to vector<8x64xf32>
    %85 = arith.mulf %84, %83 : vector<8x64xf32>
    %86 = math.tanh %85 : vector<8x64xf32>
    %cst_43 = arith.constant 5.000000e-01 : f32
    %87 = vector.broadcast %cst_43 : f32 to vector<8x64xf32>
    %88 = arith.mulf %87, %86 : vector<8x64xf32>
    %cst_44 = arith.constant 5.000000e-01 : f32
    %89 = vector.broadcast %cst_44 : f32 to vector<8x64xf32>
    %90 = arith.addf %88, %89 : vector<8x64xf32>
    %91 = vector.extract_strided_slice %82 {offsets = [0, 64], sizes = [8, 64], strides = [1, 1]} : vector<8x256xf32> to vector<8x64xf32>
    %cst_45 = arith.constant 5.000000e-01 : f32
    %92 = vector.broadcast %cst_45 : f32 to vector<8x64xf32>
    %93 = arith.mulf %92, %91 : vector<8x64xf32>
    %94 = math.tanh %93 : vector<8x64xf32>
    %cst_46 = arith.constant 5.000000e-01 : f32
    %95 = vector.broadcast %cst_46 : f32 to vector<8x64xf32>
    %96 = arith.mulf %95, %94 : vector<8x64xf32>
    %cst_47 = arith.constant 5.000000e-01 : f32
    %97 = vector.broadcast %cst_47 : f32 to vector<8x64xf32>
    %98 = arith.addf %96, %97 : vector<8x64xf32>
    %99 = vector.extract_strided_slice %82 {offsets = [0, 128], sizes = [8, 64], strides = [1, 1]} : vector<8x256xf32> to vector<8x64xf32>
    %100 = math.tanh %99 : vector<8x64xf32>
    %101 = vector.extract_strided_slice %82 {offsets = [0, 192], sizes = [8, 64], strides = [1, 1]} : vector<8x256xf32> to vector<8x64xf32>
    %cst_48 = arith.constant 5.000000e-01 : f32
    %102 = vector.broadcast %cst_48 : f32 to vector<8x64xf32>
    %103 = arith.mulf %102, %101 : vector<8x64xf32>
    %104 = math.tanh %103 : vector<8x64xf32>
    %cst_49 = arith.constant 5.000000e-01 : f32
    %105 = vector.broadcast %cst_49 : f32 to vector<8x64xf32>
    %106 = arith.mulf %105, %104 : vector<8x64xf32>
    %cst_50 = arith.constant 5.000000e-01 : f32
    %107 = vector.broadcast %cst_50 : f32 to vector<8x64xf32>
    %108 = arith.addf %106, %107 : vector<8x64xf32>
    %109 = arith.mulf %98, %65 : vector<8x64xf32>
    %110 = arith.mulf %90, %100 : vector<8x64xf32>
    %111 = arith.addf %109, %110 : vector<8x64xf32>
    %112 = math.tanh %111 : vector<8x64xf32>
    %113 = arith.mulf %108, %112 : vector<8x64xf32>
    %114 = vector.extract_strided_slice %113 {offsets = [0, 0], sizes = [8, 32], strides = [1, 1]} : vector<8x64xf32> to vector<8x32xf32>
    %115 = arith.index_cast %78 : i32 to index
    %c0_51 = arith.constant 0 : index
    %116 = vector.load %arg12[%115, %c0_51] : memref<64x32xf32, #tpu.memory_space<vmem>>, vector<8x32xf32>
    tpu.vector_store %arg12[%115, %c0_51], %114 {strides = array<i32>} : memref<64x32xf32, #tpu.memory_space<vmem>>, vector<8x32xf32>,
    %c7_i32_52 = arith.constant 7 : i32
    %117 = arith.subi %c7_i32_52, %c1_i32 : i32
    %c8_i32_53 = arith.constant 8 : i32
    %118 = arith.muli %117, %c8_i32_53 : i32
    %119 = tpu.assume_multiple %118, 8 : i32
    %120 = vector.extract_strided_slice %113 {offsets = [0, 32], sizes = [8, 32], strides = [1, 1]} : vector<8x64xf32> to vector<8x32xf32>
    %121 = arith.index_cast %119 : i32 to index
    %c0_54 = arith.constant 0 : index
    %122 = vector.load %arg13[%121, %c0_54] : memref<64x32xf32, #tpu.memory_space<vmem>>, vector<8x32xf32>
    tpu.vector_store %arg13[%121, %c0_54], %120 {strides = array<i32>} : memref<64x32xf32, #tpu.memory_space<vmem>>, vector<8x32xf32>,
    %c2_i32 = arith.constant 2 : i32
    %c8_i32_55 = arith.constant 8 : i32
    %123 = arith.muli %c2_i32, %c8_i32_55 : i32
    %124 = tpu.assume_multiple %123, 8 : i32
    %125 = arith.index_cast %124 : i32 to index
    %c0_56 = arith.constant 0 : index
    %126 = vector.load %arg11[%125, %c0_56] : memref<64x256xf32, #tpu.memory_space<vmem>>, vector<8x256xf32>
    %cst_57 = arith.constant dense<0.000000e+00> : vector<8x256xf32>
    %127 = tpu.matmul %113, %28, %cst_57 {dimension_numbers = #tpu.dot_dimension_numbers<[1], [0], [0], [1], [0, 0, 1, 1], [], []>} : vector<8x64xf32>, vector<64x256xf32>, vector<8x256xf32> -> vector<8x256xf32>
    %128 = arith.addf %127, %126 : vector<8x256xf32>
    %129 = vector.extract_strided_slice %128 {offsets = [0, 0], sizes = [8, 64], strides = [1, 1]} : vector<8x256xf32> to vector<8x64xf32>
    %cst_58 = arith.constant 5.000000e-01 : f32
    %130 = vector.broadcast %cst_58 : f32 to vector<8x64xf32>
    %131 = arith.mulf %130, %129 : vector<8x64xf32>
    %132 = math.tanh %131 : vector<8x64xf32>
    %cst_59 = arith.constant 5.000000e-01 : f32
    %133 = vector.broadcast %cst_59 : f32 to vector<8x64xf32>
    %134 = arith.mulf %133, %132 : vector<8x64xf32>
    %cst_60 = arith.constant 5.000000e-01 : f32
    %135 = vector.broadcast %cst_60 : f32 to vector<8x64xf32>
    %136 = arith.addf %134, %135 : vector<8x64xf32>
    %137 = vector.extract_strided_slice %128 {offsets = [0, 64], sizes = [8, 64], strides = [1, 1]} : vector<8x256xf32> to vector<8x64xf32>
    %cst_61 = arith.constant 5.000000e-01 : f32
    %138 = vector.broadcast %cst_61 : f32 to vector<8x64xf32>
    %139 = arith.mulf %138, %137 : vector<8x64xf32>
    %140 = math.tanh %139 : vector<8x64xf32>
    %cst_62 = arith.constant 5.000000e-01 : f32
    %141 = vector.broadcast %cst_62 : f32 to vector<8x64xf32>
    %142 = arith.mulf %141, %140 : vector<8x64xf32>
    %cst_63 = arith.constant 5.000000e-01 : f32
    %143 = vector.broadcast %cst_63 : f32 to vector<8x64xf32>
    %144 = arith.addf %142, %143 : vector<8x64xf32>
    %145 = vector.extract_strided_slice %128 {offsets = [0, 128], sizes = [8, 64], strides = [1, 1]} : vector<8x256xf32> to vector<8x64xf32>
    %146 = math.tanh %145 : vector<8x64xf32>
    %147 = vector.extract_strided_slice %128 {offsets = [0, 192], sizes = [8, 64], strides = [1, 1]} : vector<8x256xf32> to vector<8x64xf32>
    %cst_64 = arith.constant 5.000000e-01 : f32
    %148 = vector.broadcast %cst_64 : f32 to vector<8x64xf32>
    %149 = arith.mulf %148, %147 : vector<8x64xf32>
    %150 = math.tanh %149 : vector<8x64xf32>
    %cst_65 = arith.constant 5.000000e-01 : f32
    %151 = vector.broadcast %cst_65 : f32 to vector<8x64xf32>
    %152 = arith.mulf %151, %150 : vector<8x64xf32>
    %cst_66 = arith.constant 5.000000e-01 : f32
    %153 = vector.broadcast %cst_66 : f32 to vector<8x64xf32>
    %154 = arith.addf %152, %153 : vector<8x64xf32>
    %155 = arith.mulf %144, %111 : vector<8x64xf32>
    %156 = arith.mulf %136, %146 : vector<8x64xf32>
    %157 = arith.addf %155, %156 : vector<8x64xf32>
    %158 = math.tanh %157 : vector<8x64xf32>
    %159 = arith.mulf %154, %158 : vector<8x64xf32>
    %160 = vector.extract_strided_slice %159 {offsets = [0, 0], sizes = [8, 32], strides = [1, 1]} : vector<8x64xf32> to vector<8x32xf32>
    %161 = arith.index_cast %124 : i32 to index
    %c0_67 = arith.constant 0 : index
    %162 = vector.load %arg12[%161, %c0_67] : memref<64x32xf32, #tpu.memory_space<vmem>>, vector<8x32xf32>
    tpu.vector_store %arg12[%161, %c0_67], %160 {strides = array<i32>} : memref<64x32xf32, #tpu.memory_space<vmem>>, vector<8x32xf32>,
    %c7_i32_68 = arith.constant 7 : i32
    %163 = arith.subi %c7_i32_68, %c2_i32 : i32
    %c8_i32_69 = arith.constant 8 : i32
    %164 = arith.muli %163, %c8_i32_69 : i32
    %165 = tpu.assume_multiple %164, 8 : i32
    %166 = vector.extract_strided_slice %159 {offsets = [0, 32], sizes = [8, 32], strides = [1, 1]} : vector<8x64xf32> to vector<8x32xf32>
    %167 = arith.index_cast %165 : i32 to index
    %c0_70 = arith.constant 0 : index
    %168 = vector.load %arg13[%167, %c0_70] : memref<64x32xf32, #tpu.memory_space<vmem>>, vector<8x32xf32>
    tpu.vector_store %arg13[%167, %c0_70], %166 {strides = array<i32>} : memref<64x32xf32, #tpu.memory_space<vmem>>, vector<8x32xf32>,
    %c3_i32 = arith.constant 3 : i32
    %c8_i32_71 = arith.constant 8 : i32
    %169 = arith.muli %c3_i32, %c8_i32_71 : i32
    %170 = tpu.assume_multiple %169, 8 : i32
    %171 = arith.index_cast %170 : i32 to index
    %c0_72 = arith.constant 0 : index
    %172 = vector.load %arg11[%171, %c0_72] : memref<64x256xf32, #tpu.memory_space<vmem>>, vector<8x256xf32>
    %cst_73 = arith.constant dense<0.000000e+00> : vector<8x256xf32>
    %173 = tpu.matmul %159, %28, %cst_73 {dimension_numbers = #tpu.dot_dimension_numbers<[1], [0], [0], [1], [0, 0, 1, 1], [], []>} : vector<8x64xf32>, vector<64x256xf32>, vector<8x256xf32> -> vector<8x256xf32>
    %174 = arith.addf %173, %172 : vector<8x256xf32>
    %175 = vector.extract_strided_slice %174 {offsets = [0, 0], sizes = [8, 64], strides = [1, 1]} : vector<8x256xf32> to vector<8x64xf32>
    %cst_74 = arith.constant 5.000000e-01 : f32
    %176 = vector.broadcast %cst_74 : f32 to vector<8x64xf32>
    %177 = arith.mulf %176, %175 : vector<8x64xf32>
    %178 = math.tanh %177 : vector<8x64xf32>
    %cst_75 = arith.constant 5.000000e-01 : f32
    %179 = vector.broadcast %cst_75 : f32 to vector<8x64xf32>
    %180 = arith.mulf %179, %178 : vector<8x64xf32>
    %cst_76 = arith.constant 5.000000e-01 : f32
    %181 = vector.broadcast %cst_76 : f32 to vector<8x64xf32>
    %182 = arith.addf %180, %181 : vector<8x64xf32>
    %183 = vector.extract_strided_slice %174 {offsets = [0, 64], sizes = [8, 64], strides = [1, 1]} : vector<8x256xf32> to vector<8x64xf32>
    %cst_77 = arith.constant 5.000000e-01 : f32
    %184 = vector.broadcast %cst_77 : f32 to vector<8x64xf32>
    %185 = arith.mulf %184, %183 : vector<8x64xf32>
    %186 = math.tanh %185 : vector<8x64xf32>
    %cst_78 = arith.constant 5.000000e-01 : f32
    %187 = vector.broadcast %cst_78 : f32 to vector<8x64xf32>
    %188 = arith.mulf %187, %186 : vector<8x64xf32>
    %cst_79 = arith.constant 5.000000e-01 : f32
    %189 = vector.broadcast %cst_79 : f32 to vector<8x64xf32>
    %190 = arith.addf %188, %189 : vector<8x64xf32>
    %191 = vector.extract_strided_slice %174 {offsets = [0, 128], sizes = [8, 64], strides = [1, 1]} : vector<8x256xf32> to vector<8x64xf32>
    %192 = math.tanh %191 : vector<8x64xf32>
    %193 = vector.extract_strided_slice %174 {offsets = [0, 192], sizes = [8, 64], strides = [1, 1]} : vector<8x256xf32> to vector<8x64xf32>
    %cst_80 = arith.constant 5.000000e-01 : f32
    %194 = vector.broadcast %cst_80 : f32 to vector<8x64xf32>
    %195 = arith.mulf %194, %193 : vector<8x64xf32>
    %196 = math.tanh %195 : vector<8x64xf32>
    %cst_81 = arith.constant 5.000000e-01 : f32
    %197 = vector.broadcast %cst_81 : f32 to vector<8x64xf32>
    %198 = arith.mulf %197, %196 : vector<8x64xf32>
    %cst_82 = arith.constant 5.000000e-01 : f32
    %199 = vector.broadcast %cst_82 : f32 to vector<8x64xf32>
    %200 = arith.addf %198, %199 : vector<8x64xf32>
    %201 = arith.mulf %190, %157 : vector<8x64xf32>
    %202 = arith.mulf %182, %192 : vector<8x64xf32>
    %203 = arith.addf %201, %202 : vector<8x64xf32>
    %204 = math.tanh %203 : vector<8x64xf32>
    %205 = arith.mulf %200, %204 : vector<8x64xf32>
    %206 = vector.extract_strided_slice %205 {offsets = [0, 0], sizes = [8, 32], strides = [1, 1]} : vector<8x64xf32> to vector<8x32xf32>
    %207 = arith.index_cast %170 : i32 to index
    %c0_83 = arith.constant 0 : index
    %208 = vector.load %arg12[%207, %c0_83] : memref<64x32xf32, #tpu.memory_space<vmem>>, vector<8x32xf32>
    tpu.vector_store %arg12[%207, %c0_83], %206 {strides = array<i32>} : memref<64x32xf32, #tpu.memory_space<vmem>>, vector<8x32xf32>,
    %c7_i32_84 = arith.constant 7 : i32
    %209 = arith.subi %c7_i32_84, %c3_i32 : i32
    %c8_i32_85 = arith.constant 8 : i32
    %210 = arith.muli %209, %c8_i32_85 : i32
    %211 = tpu.assume_multiple %210, 8 : i32
    %212 = vector.extract_strided_slice %205 {offsets = [0, 32], sizes = [8, 32], strides = [1, 1]} : vector<8x64xf32> to vector<8x32xf32>
    %213 = arith.index_cast %211 : i32 to index
    %c0_86 = arith.constant 0 : index
    %214 = vector.load %arg13[%213, %c0_86] : memref<64x32xf32, #tpu.memory_space<vmem>>, vector<8x32xf32>
    tpu.vector_store %arg13[%213, %c0_86], %212 {strides = array<i32>} : memref<64x32xf32, #tpu.memory_space<vmem>>, vector<8x32xf32>,
    %c4_i32 = arith.constant 4 : i32
    %c8_i32_87 = arith.constant 8 : i32
    %215 = arith.muli %c4_i32, %c8_i32_87 : i32
    %216 = tpu.assume_multiple %215, 8 : i32
    %217 = arith.index_cast %216 : i32 to index
    %c0_88 = arith.constant 0 : index
    %218 = vector.load %arg11[%217, %c0_88] : memref<64x256xf32, #tpu.memory_space<vmem>>, vector<8x256xf32>
    %cst_89 = arith.constant dense<0.000000e+00> : vector<8x256xf32>
    %219 = tpu.matmul %205, %28, %cst_89 {dimension_numbers = #tpu.dot_dimension_numbers<[1], [0], [0], [1], [0, 0, 1, 1], [], []>} : vector<8x64xf32>, vector<64x256xf32>, vector<8x256xf32> -> vector<8x256xf32>
    %220 = arith.addf %219, %218 : vector<8x256xf32>
    %221 = vector.extract_strided_slice %220 {offsets = [0, 0], sizes = [8, 64], strides = [1, 1]} : vector<8x256xf32> to vector<8x64xf32>
    %cst_90 = arith.constant 5.000000e-01 : f32
    %222 = vector.broadcast %cst_90 : f32 to vector<8x64xf32>
    %223 = arith.mulf %222, %221 : vector<8x64xf32>
    %224 = math.tanh %223 : vector<8x64xf32>
    %cst_91 = arith.constant 5.000000e-01 : f32
    %225 = vector.broadcast %cst_91 : f32 to vector<8x64xf32>
    %226 = arith.mulf %225, %224 : vector<8x64xf32>
    %cst_92 = arith.constant 5.000000e-01 : f32
    %227 = vector.broadcast %cst_92 : f32 to vector<8x64xf32>
    %228 = arith.addf %226, %227 : vector<8x64xf32>
    %229 = vector.extract_strided_slice %220 {offsets = [0, 64], sizes = [8, 64], strides = [1, 1]} : vector<8x256xf32> to vector<8x64xf32>
    %cst_93 = arith.constant 5.000000e-01 : f32
    %230 = vector.broadcast %cst_93 : f32 to vector<8x64xf32>
    %231 = arith.mulf %230, %229 : vector<8x64xf32>
    %232 = math.tanh %231 : vector<8x64xf32>
    %cst_94 = arith.constant 5.000000e-01 : f32
    %233 = vector.broadcast %cst_94 : f32 to vector<8x64xf32>
    %234 = arith.mulf %233, %232 : vector<8x64xf32>
    %cst_95 = arith.constant 5.000000e-01 : f32
    %235 = vector.broadcast %cst_95 : f32 to vector<8x64xf32>
    %236 = arith.addf %234, %235 : vector<8x64xf32>
    %237 = vector.extract_strided_slice %220 {offsets = [0, 128], sizes = [8, 64], strides = [1, 1]} : vector<8x256xf32> to vector<8x64xf32>
    %238 = math.tanh %237 : vector<8x64xf32>
    %239 = vector.extract_strided_slice %220 {offsets = [0, 192], sizes = [8, 64], strides = [1, 1]} : vector<8x256xf32> to vector<8x64xf32>
    %cst_96 = arith.constant 5.000000e-01 : f32
    %240 = vector.broadcast %cst_96 : f32 to vector<8x64xf32>
    %241 = arith.mulf %240, %239 : vector<8x64xf32>
    %242 = math.tanh %241 : vector<8x64xf32>
    %cst_97 = arith.constant 5.000000e-01 : f32
    %243 = vector.broadcast %cst_97 : f32 to vector<8x64xf32>
    %244 = arith.mulf %243, %242 : vector<8x64xf32>
    %cst_98 = arith.constant 5.000000e-01 : f32
    %245 = vector.broadcast %cst_98 : f32 to vector<8x64xf32>
    %246 = arith.addf %244, %245 : vector<8x64xf32>
    %247 = arith.mulf %236, %203 : vector<8x64xf32>
    %248 = arith.mulf %228, %238 : vector<8x64xf32>
    %249 = arith.addf %247, %248 : vector<8x64xf32>
    %250 = math.tanh %249 : vector<8x64xf32>
    %251 = arith.mulf %246, %250 : vector<8x64xf32>
    %252 = vector.extract_strided_slice %251 {offsets = [0, 0], sizes = [8, 32], strides = [1, 1]} : vector<8x64xf32> to vector<8x32xf32>
    %253 = arith.index_cast %216 : i32 to index
    %c0_99 = arith.constant 0 : index
    %254 = vector.load %arg12[%253, %c0_99] : memref<64x32xf32, #tpu.memory_space<vmem>>, vector<8x32xf32>
    tpu.vector_store %arg12[%253, %c0_99], %252 {strides = array<i32>} : memref<64x32xf32, #tpu.memory_space<vmem>>, vector<8x32xf32>,
    %c7_i32_100 = arith.constant 7 : i32
    %255 = arith.subi %c7_i32_100, %c4_i32 : i32
    %c8_i32_101 = arith.constant 8 : i32
    %256 = arith.muli %255, %c8_i32_101 : i32
    %257 = tpu.assume_multiple %256, 8 : i32
    %258 = vector.extract_strided_slice %251 {offsets = [0, 32], sizes = [8, 32], strides = [1, 1]} : vector<8x64xf32> to vector<8x32xf32>
    %259 = arith.index_cast %257 : i32 to index
    %c0_102 = arith.constant 0 : index
    %260 = vector.load %arg13[%259, %c0_102] : memref<64x32xf32, #tpu.memory_space<vmem>>, vector<8x32xf32>
    tpu.vector_store %arg13[%259, %c0_102], %258 {strides = array<i32>} : memref<64x32xf32, #tpu.memory_space<vmem>>, vector<8x32xf32>,
    %c5_i32 = arith.constant 5 : i32
    %c8_i32_103 = arith.constant 8 : i32
    %261 = arith.muli %c5_i32, %c8_i32_103 : i32
    %262 = tpu.assume_multiple %261, 8 : i32
    %263 = arith.index_cast %262 : i32 to index
    %c0_104 = arith.constant 0 : index
    %264 = vector.load %arg11[%263, %c0_104] : memref<64x256xf32, #tpu.memory_space<vmem>>, vector<8x256xf32>
    %cst_105 = arith.constant dense<0.000000e+00> : vector<8x256xf32>
    %265 = tpu.matmul %251, %28, %cst_105 {dimension_numbers = #tpu.dot_dimension_numbers<[1], [0], [0], [1], [0, 0, 1, 1], [], []>} : vector<8x64xf32>, vector<64x256xf32>, vector<8x256xf32> -> vector<8x256xf32>
    %266 = arith.addf %265, %264 : vector<8x256xf32>
    %267 = vector.extract_strided_slice %266 {offsets = [0, 0], sizes = [8, 64], strides = [1, 1]} : vector<8x256xf32> to vector<8x64xf32>
    %cst_106 = arith.constant 5.000000e-01 : f32
    %268 = vector.broadcast %cst_106 : f32 to vector<8x64xf32>
    %269 = arith.mulf %268, %267 : vector<8x64xf32>
    %270 = math.tanh %269 : vector<8x64xf32>
    %cst_107 = arith.constant 5.000000e-01 : f32
    %271 = vector.broadcast %cst_107 : f32 to vector<8x64xf32>
    %272 = arith.mulf %271, %270 : vector<8x64xf32>
    %cst_108 = arith.constant 5.000000e-01 : f32
    %273 = vector.broadcast %cst_108 : f32 to vector<8x64xf32>
    %274 = arith.addf %272, %273 : vector<8x64xf32>
    %275 = vector.extract_strided_slice %266 {offsets = [0, 64], sizes = [8, 64], strides = [1, 1]} : vector<8x256xf32> to vector<8x64xf32>
    %cst_109 = arith.constant 5.000000e-01 : f32
    %276 = vector.broadcast %cst_109 : f32 to vector<8x64xf32>
    %277 = arith.mulf %276, %275 : vector<8x64xf32>
    %278 = math.tanh %277 : vector<8x64xf32>
    %cst_110 = arith.constant 5.000000e-01 : f32
    %279 = vector.broadcast %cst_110 : f32 to vector<8x64xf32>
    %280 = arith.mulf %279, %278 : vector<8x64xf32>
    %cst_111 = arith.constant 5.000000e-01 : f32
    %281 = vector.broadcast %cst_111 : f32 to vector<8x64xf32>
    %282 = arith.addf %280, %281 : vector<8x64xf32>
    %283 = vector.extract_strided_slice %266 {offsets = [0, 128], sizes = [8, 64], strides = [1, 1]} : vector<8x256xf32> to vector<8x64xf32>
    %284 = math.tanh %283 : vector<8x64xf32>
    %285 = vector.extract_strided_slice %266 {offsets = [0, 192], sizes = [8, 64], strides = [1, 1]} : vector<8x256xf32> to vector<8x64xf32>
    %cst_112 = arith.constant 5.000000e-01 : f32
    %286 = vector.broadcast %cst_112 : f32 to vector<8x64xf32>
    %287 = arith.mulf %286, %285 : vector<8x64xf32>
    %288 = math.tanh %287 : vector<8x64xf32>
    %cst_113 = arith.constant 5.000000e-01 : f32
    %289 = vector.broadcast %cst_113 : f32 to vector<8x64xf32>
    %290 = arith.mulf %289, %288 : vector<8x64xf32>
    %cst_114 = arith.constant 5.000000e-01 : f32
    %291 = vector.broadcast %cst_114 : f32 to vector<8x64xf32>
    %292 = arith.addf %290, %291 : vector<8x64xf32>
    %293 = arith.mulf %282, %249 : vector<8x64xf32>
    %294 = arith.mulf %274, %284 : vector<8x64xf32>
    %295 = arith.addf %293, %294 : vector<8x64xf32>
    %296 = math.tanh %295 : vector<8x64xf32>
    %297 = arith.mulf %292, %296 : vector<8x64xf32>
    %298 = vector.extract_strided_slice %297 {offsets = [0, 0], sizes = [8, 32], strides = [1, 1]} : vector<8x64xf32> to vector<8x32xf32>
    %299 = arith.index_cast %262 : i32 to index
    %c0_115 = arith.constant 0 : index
    %300 = vector.load %arg12[%299, %c0_115] : memref<64x32xf32, #tpu.memory_space<vmem>>, vector<8x32xf32>
    tpu.vector_store %arg12[%299, %c0_115], %298 {strides = array<i32>} : memref<64x32xf32, #tpu.memory_space<vmem>>, vector<8x32xf32>,
    %c7_i32_116 = arith.constant 7 : i32
    %301 = arith.subi %c7_i32_116, %c5_i32 : i32
    %c8_i32_117 = arith.constant 8 : i32
    %302 = arith.muli %301, %c8_i32_117 : i32
    %303 = tpu.assume_multiple %302, 8 : i32
    %304 = vector.extract_strided_slice %297 {offsets = [0, 32], sizes = [8, 32], strides = [1, 1]} : vector<8x64xf32> to vector<8x32xf32>
    %305 = arith.index_cast %303 : i32 to index
    %c0_118 = arith.constant 0 : index
    %306 = vector.load %arg13[%305, %c0_118] : memref<64x32xf32, #tpu.memory_space<vmem>>, vector<8x32xf32>
    tpu.vector_store %arg13[%305, %c0_118], %304 {strides = array<i32>} : memref<64x32xf32, #tpu.memory_space<vmem>>, vector<8x32xf32>,
    %c6_i32 = arith.constant 6 : i32
    %c8_i32_119 = arith.constant 8 : i32
    %307 = arith.muli %c6_i32, %c8_i32_119 : i32
    %308 = tpu.assume_multiple %307, 8 : i32
    %309 = arith.index_cast %308 : i32 to index
    %c0_120 = arith.constant 0 : index
    %310 = vector.load %arg11[%309, %c0_120] : memref<64x256xf32, #tpu.memory_space<vmem>>, vector<8x256xf32>
    %cst_121 = arith.constant dense<0.000000e+00> : vector<8x256xf32>
    %311 = tpu.matmul %297, %28, %cst_121 {dimension_numbers = #tpu.dot_dimension_numbers<[1], [0], [0], [1], [0, 0, 1, 1], [], []>} : vector<8x64xf32>, vector<64x256xf32>, vector<8x256xf32> -> vector<8x256xf32>
    %312 = arith.addf %311, %310 : vector<8x256xf32>
    %313 = vector.extract_strided_slice %312 {offsets = [0, 0], sizes = [8, 64], strides = [1, 1]} : vector<8x256xf32> to vector<8x64xf32>
    %cst_122 = arith.constant 5.000000e-01 : f32
    %314 = vector.broadcast %cst_122 : f32 to vector<8x64xf32>
    %315 = arith.mulf %314, %313 : vector<8x64xf32>
    %316 = math.tanh %315 : vector<8x64xf32>
    %cst_123 = arith.constant 5.000000e-01 : f32
    %317 = vector.broadcast %cst_123 : f32 to vector<8x64xf32>
    %318 = arith.mulf %317, %316 : vector<8x64xf32>
    %cst_124 = arith.constant 5.000000e-01 : f32
    %319 = vector.broadcast %cst_124 : f32 to vector<8x64xf32>
    %320 = arith.addf %318, %319 : vector<8x64xf32>
    %321 = vector.extract_strided_slice %312 {offsets = [0, 64], sizes = [8, 64], strides = [1, 1]} : vector<8x256xf32> to vector<8x64xf32>
    %cst_125 = arith.constant 5.000000e-01 : f32
    %322 = vector.broadcast %cst_125 : f32 to vector<8x64xf32>
    %323 = arith.mulf %322, %321 : vector<8x64xf32>
    %324 = math.tanh %323 : vector<8x64xf32>
    %cst_126 = arith.constant 5.000000e-01 : f32
    %325 = vector.broadcast %cst_126 : f32 to vector<8x64xf32>
    %326 = arith.mulf %325, %324 : vector<8x64xf32>
    %cst_127 = arith.constant 5.000000e-01 : f32
    %327 = vector.broadcast %cst_127 : f32 to vector<8x64xf32>
    %328 = arith.addf %326, %327 : vector<8x64xf32>
    %329 = vector.extract_strided_slice %312 {offsets = [0, 128], sizes = [8, 64], strides = [1, 1]} : vector<8x256xf32> to vector<8x64xf32>
    %330 = math.tanh %329 : vector<8x64xf32>
    %331 = vector.extract_strided_slice %312 {offsets = [0, 192], sizes = [8, 64], strides = [1, 1]} : vector<8x256xf32> to vector<8x64xf32>
    %cst_128 = arith.constant 5.000000e-01 : f32
    %332 = vector.broadcast %cst_128 : f32 to vector<8x64xf32>
    %333 = arith.mulf %332, %331 : vector<8x64xf32>
    %334 = math.tanh %333 : vector<8x64xf32>
    %cst_129 = arith.constant 5.000000e-01 : f32
    %335 = vector.broadcast %cst_129 : f32 to vector<8x64xf32>
    %336 = arith.mulf %335, %334 : vector<8x64xf32>
    %cst_130 = arith.constant 5.000000e-01 : f32
    %337 = vector.broadcast %cst_130 : f32 to vector<8x64xf32>
    %338 = arith.addf %336, %337 : vector<8x64xf32>
    %339 = arith.mulf %328, %295 : vector<8x64xf32>
    %340 = arith.mulf %320, %330 : vector<8x64xf32>
    %341 = arith.addf %339, %340 : vector<8x64xf32>
    %342 = math.tanh %341 : vector<8x64xf32>
    %343 = arith.mulf %338, %342 : vector<8x64xf32>
    %344 = vector.extract_strided_slice %343 {offsets = [0, 0], sizes = [8, 32], strides = [1, 1]} : vector<8x64xf32> to vector<8x32xf32>
    %345 = arith.index_cast %308 : i32 to index
    %c0_131 = arith.constant 0 : index
    %346 = vector.load %arg12[%345, %c0_131] : memref<64x32xf32, #tpu.memory_space<vmem>>, vector<8x32xf32>
    tpu.vector_store %arg12[%345, %c0_131], %344 {strides = array<i32>} : memref<64x32xf32, #tpu.memory_space<vmem>>, vector<8x32xf32>,
    %c7_i32_132 = arith.constant 7 : i32
    %347 = arith.subi %c7_i32_132, %c6_i32 : i32
    %c8_i32_133 = arith.constant 8 : i32
    %348 = arith.muli %347, %c8_i32_133 : i32
    %349 = tpu.assume_multiple %348, 8 : i32
    %350 = vector.extract_strided_slice %343 {offsets = [0, 32], sizes = [8, 32], strides = [1, 1]} : vector<8x64xf32> to vector<8x32xf32>
    %351 = arith.index_cast %349 : i32 to index
    %c0_134 = arith.constant 0 : index
    %352 = vector.load %arg13[%351, %c0_134] : memref<64x32xf32, #tpu.memory_space<vmem>>, vector<8x32xf32>
    tpu.vector_store %arg13[%351, %c0_134], %350 {strides = array<i32>} : memref<64x32xf32, #tpu.memory_space<vmem>>, vector<8x32xf32>,
    %c7_i32_135 = arith.constant 7 : i32
    %c8_i32_136 = arith.constant 8 : i32
    %353 = arith.muli %c7_i32_135, %c8_i32_136 : i32
    %354 = tpu.assume_multiple %353, 8 : i32
    %355 = arith.index_cast %354 : i32 to index
    %c0_137 = arith.constant 0 : index
    %356 = vector.load %arg11[%355, %c0_137] : memref<64x256xf32, #tpu.memory_space<vmem>>, vector<8x256xf32>
    %cst_138 = arith.constant dense<0.000000e+00> : vector<8x256xf32>
    %357 = tpu.matmul %343, %28, %cst_138 {dimension_numbers = #tpu.dot_dimension_numbers<[1], [0], [0], [1], [0, 0, 1, 1], [], []>} : vector<8x64xf32>, vector<64x256xf32>, vector<8x256xf32> -> vector<8x256xf32>
    %358 = arith.addf %357, %356 : vector<8x256xf32>
    %359 = vector.extract_strided_slice %358 {offsets = [0, 0], sizes = [8, 64], strides = [1, 1]} : vector<8x256xf32> to vector<8x64xf32>
    %cst_139 = arith.constant 5.000000e-01 : f32
    %360 = vector.broadcast %cst_139 : f32 to vector<8x64xf32>
    %361 = arith.mulf %360, %359 : vector<8x64xf32>
    %362 = math.tanh %361 : vector<8x64xf32>
    %cst_140 = arith.constant 5.000000e-01 : f32
    %363 = vector.broadcast %cst_140 : f32 to vector<8x64xf32>
    %364 = arith.mulf %363, %362 : vector<8x64xf32>
    %cst_141 = arith.constant 5.000000e-01 : f32
    %365 = vector.broadcast %cst_141 : f32 to vector<8x64xf32>
    %366 = arith.addf %364, %365 : vector<8x64xf32>
    %367 = vector.extract_strided_slice %358 {offsets = [0, 64], sizes = [8, 64], strides = [1, 1]} : vector<8x256xf32> to vector<8x64xf32>
    %cst_142 = arith.constant 5.000000e-01 : f32
    %368 = vector.broadcast %cst_142 : f32 to vector<8x64xf32>
    %369 = arith.mulf %368, %367 : vector<8x64xf32>
    %370 = math.tanh %369 : vector<8x64xf32>
    %cst_143 = arith.constant 5.000000e-01 : f32
    %371 = vector.broadcast %cst_143 : f32 to vector<8x64xf32>
    %372 = arith.mulf %371, %370 : vector<8x64xf32>
    %cst_144 = arith.constant 5.000000e-01 : f32
    %373 = vector.broadcast %cst_144 : f32 to vector<8x64xf32>
    %374 = arith.addf %372, %373 : vector<8x64xf32>
    %375 = vector.extract_strided_slice %358 {offsets = [0, 128], sizes = [8, 64], strides = [1, 1]} : vector<8x256xf32> to vector<8x64xf32>
    %376 = math.tanh %375 : vector<8x64xf32>
    %377 = vector.extract_strided_slice %358 {offsets = [0, 192], sizes = [8, 64], strides = [1, 1]} : vector<8x256xf32> to vector<8x64xf32>
    %cst_145 = arith.constant 5.000000e-01 : f32
    %378 = vector.broadcast %cst_145 : f32 to vector<8x64xf32>
    %379 = arith.mulf %378, %377 : vector<8x64xf32>
    %380 = math.tanh %379 : vector<8x64xf32>
    %cst_146 = arith.constant 5.000000e-01 : f32
    %381 = vector.broadcast %cst_146 : f32 to vector<8x64xf32>
    %382 = arith.mulf %381, %380 : vector<8x64xf32>
    %cst_147 = arith.constant 5.000000e-01 : f32
    %383 = vector.broadcast %cst_147 : f32 to vector<8x64xf32>
    %384 = arith.addf %382, %383 : vector<8x64xf32>
    %385 = arith.mulf %374, %341 : vector<8x64xf32>
    %386 = arith.mulf %366, %376 : vector<8x64xf32>
    %387 = arith.addf %385, %386 : vector<8x64xf32>
    %388 = math.tanh %387 : vector<8x64xf32>
    %389 = arith.mulf %384, %388 : vector<8x64xf32>
    %390 = vector.extract_strided_slice %389 {offsets = [0, 0], sizes = [8, 32], strides = [1, 1]} : vector<8x64xf32> to vector<8x32xf32>
    %391 = arith.index_cast %354 : i32 to index
    %c0_148 = arith.constant 0 : index
    %392 = vector.load %arg12[%391, %c0_148] : memref<64x32xf32, #tpu.memory_space<vmem>>, vector<8x32xf32>
    tpu.vector_store %arg12[%391, %c0_148], %390 {strides = array<i32>} : memref<64x32xf32, #tpu.memory_space<vmem>>, vector<8x32xf32>,
    %c7_i32_149 = arith.constant 7 : i32
    %393 = arith.subi %c7_i32_149, %c7_i32_135 : i32
    %c8_i32_150 = arith.constant 8 : i32
    %394 = arith.muli %393, %c8_i32_150 : i32
    %395 = tpu.assume_multiple %394, 8 : i32
    %396 = vector.extract_strided_slice %389 {offsets = [0, 32], sizes = [8, 32], strides = [1, 1]} : vector<8x64xf32> to vector<8x32xf32>
    %397 = arith.index_cast %395 : i32 to index
    %c0_151 = arith.constant 0 : index
    %398 = vector.load %arg13[%397, %c0_151] : memref<64x32xf32, #tpu.memory_space<vmem>>, vector<8x32xf32>
    tpu.vector_store %arg13[%397, %c0_151], %396 {strides = array<i32>} : memref<64x32xf32, #tpu.memory_space<vmem>>, vector<8x32xf32>,
    %c8_i32_152 = arith.constant 8 : i32
    %c0_153 = arith.constant 0 : index
    %c0_154 = arith.constant 0 : index
    %399 = vector.load %arg12[%c0_153, %c0_154] : memref<64x32xf32, #tpu.memory_space<vmem>>, vector<64x32xf32>
    %c0_155 = arith.constant 0 : index
    %c0_156 = arith.constant 0 : index
    %400 = vector.load %arg7[%c0_155, %c0_156] : memref<32x128xf32, #tpu.memory_space<vmem>>, vector<32x128xf32>
    %cst_157 = arith.constant dense<0.000000e+00> : vector<64x128xf32>
    %401 = tpu.matmul %399, %400, %cst_157 {dimension_numbers = #tpu.dot_dimension_numbers<[1], [0], [0], [1], [0, 0, 1, 1], [], []>} : vector<64x32xf32>, vector<32x128xf32>, vector<64x128xf32> -> vector<64x128xf32>
    %c0_158 = arith.constant 0 : index
    %c0_159 = arith.constant 0 : index
    %402 = vector.load %arg13[%c0_158, %c0_159] : memref<64x32xf32, #tpu.memory_space<vmem>>, vector<64x32xf32>
    %c0_160 = arith.constant 0 : index
    %c0_161 = arith.constant 0 : index
    %403 = vector.load %arg8[%c0_160, %c0_161] : memref<32x128xf32, #tpu.memory_space<vmem>>, vector<32x128xf32>
    %cst_162 = arith.constant dense<0.000000e+00> : vector<64x128xf32>
    %404 = tpu.matmul %402, %403, %cst_162 {dimension_numbers = #tpu.dot_dimension_numbers<[1], [0], [0], [1], [0, 0, 1, 1], [], []>} : vector<64x32xf32>, vector<32x128xf32>, vector<64x128xf32> -> vector<64x128xf32>
    %405 = arith.addf %401, %404 : vector<64x128xf32>
    %c0_163 = arith.constant 0 : index
    %c0_164 = arith.constant 0 : index
    %406 = vector.load %arg9[%c0_163, %c0_164] : memref<1x128xf32, #tpu.memory_space<vmem>>, vector<1x128xf32>
    %407 = vector.broadcast %406 : vector<1x128xf32> to vector<64x128xf32>
    %408 = arith.addf %405, %407 : vector<64x128xf32>
    %c0_165 = arith.constant 0 : index
    %c0_166 = arith.constant 0 : index
    %409 = vector.load %arg10[%c0_165, %c0_166] : memref<64x128xf32, #tpu.memory_space<vmem>>, vector<64x128xf32>
    tpu.vector_store %arg10[%c0_165, %c0_166], %408 {strides = array<i32>} : memref<64x128xf32, #tpu.memory_space<vmem>>, vector<64x128xf32>,
    return
  }
}

</mosaic_0001>

<llo_original>
// kernel: tpu_custom_call.1
$region0: #{tpu_custom_call.1}
  #allocation0 [shape = 'u32[]', space=smem, size = 0x4, offset = 0x4, fixed_abs, tag = 'smem constant byte address 0x4 - core index']
  #allocation1 [shape = 'u32[144,128]{1,0:T(1,128)}', space=vmem, size = 0x12000, scoped, tag = 'internal scratch']
  #allocation2 [shape = 'f32[64,256]{1,0:T(8,128)}', space=vmem, size = 0x10000, scoped, tag = 'scratch operand']
  #allocation3 [shape = 'f32[64,32]{1,0:T(8,128)}', space=vmem, size = 0x8000, scoped, tag = 'scratch operand']
  #allocation4 [shape = 'f32[64,32]{1,0:T(8,128)}', space=vmem, size = 0x8000, scoped, tag = 'scratch operand']
  %s0 = inlined_call_operand.vmem [shape: f32[64,16], index: 0, kind: input, shape index: {}]
  %s1 = inlined_call_operand.vmem [shape: f32[64,16], index: 1, kind: input, shape index: {}]
  %s2 = inlined_call_operand.hbm [shape: f32[16,128], index: 2, kind: input, shape index: {}]
  %s3 = inlined_call_operand.hbm [shape: f32[16,128], index: 3, kind: input, shape index: {}]
  %s4 = inlined_call_operand.vmem [shape: f32[64,256], index: 4, kind: input, shape index: {}]
  %s5 = inlined_call_operand.vmem [shape: f32[1,128], index: 5, kind: input, shape index: {}]
  %s6 = inlined_call_operand.vmem [shape: f32[1,128], index: 6, kind: input, shape index: {}]
  %s7 = inlined_call_operand.vmem [shape: f32[32,128], index: 7, kind: input, shape index: {}]
  %s8 = inlined_call_operand.hbm [shape: f32[32,128], index: 8, kind: input, shape index: {}]
  %s9 = inlined_call_operand.vmem [shape: f32[1,128], index: 9, kind: input, shape index: {}]
  %s10 = inlined_call_operand.hbm [shape: f32[64,128], index: 10, kind: output, shape index: {}]
  %s11 = sld [smem:[#allocation0]]
  $region62: #{tpu_custom_call.1} parent=0
    _
  %s13 = ssub.s32 1, %s11
  %s14 = scalar_select 0, %s13, %s11
  $region1: #{tpu_custom_call.1} parent=0
    #allocation5 [shape = 'u8[8192]{0}', space=vmem, size = 0x2000, scoped, tag = 'input window, operand 2, single buffered']
    #allocation6 [shape = 's32[1]{0}', space=sflag, size = 0x4, scoped, tag = 'scoped memory for tpu_custom_call.1']
    #allocation7 [shape = 's32[1]{0}', space=sflag, size = 0x4, scoped, tag = 'scoped memory for tpu_custom_call.1']
    #allocation8 [shape = 'u8[8192]{0}', space=vmem, size = 0x2000, scoped, tag = 'input window, operand 3, single buffered']
    #allocation9 [shape = 's32[1]{0}', space=sflag, size = 0x4, scoped, tag = 'scoped memory for tpu_custom_call.1']
    #allocation10 [shape = 'u8[16384]{0}', space=vmem, size = 0x4000, scoped, tag = 'input window, operand 8, single buffered']
    #allocation11 [shape = 'u8[32768]{0}', space=vmem, size = 0x8000, scoped, tag = 'output window, operand 0, single buffered']
    %15 = vsyncpa [#allocation6], 0
    %16 = vsyncpa [#allocation9], 0
    %17 = vsyncpa [#allocation7], 0
    // Predicated region
    $region2: #{tpu_custom_call.1} parent=1 // pred_check
      _
    $region3: #{tpu_custom_call.1} parent=1 // pred_check_branch
      %19 = sbr.rel (0) target = $region5
    $region4: #{tpu_custom_call.1} parent=1 // pred_region
      _
    $region5: #{tpu_custom_call.1} parent=1 // pred_fallthru
      _
    // Predicated region
    $region6: #{tpu_custom_call.1} parent=1 // pred_check
      _
    $region7: #{tpu_custom_call.1} parent=1 // pred_check_branch
      %21 = sbr.rel (0) target = $region9
    $region8: #{tpu_custom_call.1} parent=1 // pred_region
      _
    $region9: #{tpu_custom_call.1} parent=1 // pred_fallthru
      _
    // Predicated region
    $region10: #{tpu_custom_call.1} parent=1 // pred_check
      _
    $region11: #{tpu_custom_call.1} parent=1 // pred_check_branch
      %23 = sbr.rel (0) target = $region13
    $region12: #{tpu_custom_call.1} parent=1 // pred_region
      %s25 = ssub.s32 256, 256
      %26 = vsyncadd [#allocation6], %s25
      %s27 = sshll.u32 [#allocation5], 4
      %s28 = int_to_ptr.vmem [resolvable:$true] %s27
      %33 = dma.hbm_to_vmem [thread:$0]  %s2, 256, %s28, [#allocation6], 128, 128, 8
    $region13: #{tpu_custom_call.1} parent=1 // pred_fallthru
      _
    // Predicated region
    $region14: #{tpu_custom_call.1} parent=1 // pred_check
      _
    $region15: #{tpu_custom_call.1} parent=1 // pred_check_branch
      %35 = sbr.rel (0) target = $region17
    $region16: #{tpu_custom_call.1} parent=1 // pred_region
      %s37 = ssub.s32 256, 256
      %38 = vsyncadd [#allocation9], %s37
      %s39 = sshll.u32 [#allocation8], 4
      %s40 = int_to_ptr.vmem [resolvable:$true] %s39
      %45 = dma.hbm_to_vmem [thread:$0]  %s3, 256, %s40, [#allocation9], 128, 128, 8
    $region17: #{tpu_custom_call.1} parent=1 // pred_fallthru
      _
    // Predicated region
    $region18: #{tpu_custom_call.1} parent=1 // pred_check
      _
    $region19: #{tpu_custom_call.1} parent=1 // pred_check_branch
      %47 = sbr.rel (0) target = $region21
    $region20: #{tpu_custom_call.1} parent=1 // pred_region
      _
    $region21: #{tpu_custom_call.1} parent=1 // pred_fallthru
      _
    // Predicated region
    $region22: #{tpu_custom_call.1} parent=1 // pred_check
      _
    $region23: #{tpu_custom_call.1} parent=1 // pred_check_branch
      %49 = sbr.rel (0) target = $region25
    $region24: #{tpu_custom_call.1} parent=1 // pred_region
      _
    $region25: #{tpu_custom_call.1} parent=1 // pred_fallthru
      _
    // Predicated region
    $region26: #{tpu_custom_call.1} parent=1 // pred_check
      _
    $region27: #{tpu_custom_call.1} parent=1 // pred_check_branch
      %51 = sbr.rel (0) target = $region29
    $region28: #{tpu_custom_call.1} parent=1 // pred_region
      _
    $region29: #{tpu_custom_call.1} parent=1 // pred_fallthru
      _
    // Predicated region
    $region30: #{tpu_custom_call.1} parent=1 // pred_check
      _
    $region31: #{tpu_custom_call.1} parent=1 // pred_check_branch
      %53 = sbr.rel (0) target = $region33
    $region32: #{tpu_custom_call.1} parent=1 // pred_region
      _
    $region33: #{tpu_custom_call.1} parent=1 // pred_fallthru
      _
    // Predicated region
    $region34: #{tpu_custom_call.1} parent=1 // pred_check
      _
    $region35: #{tpu_custom_call.1} parent=1 // pred_check_branch
      %55 = sbr.rel (0) target = $region37
    $region36: #{tpu_custom_call.1} parent=1 // pred_region
      %s57 = ssub.s32 512, 512
      %58 = vsyncadd [#allocation9], %s57
      %s59 = sshll.u32 [#allocation10], 4
      %s60 = int_to_ptr.vmem [resolvable:$true] %s59
      %65 = dma.hbm_to_vmem [thread:$0]  %s8, 512, %s60, [#allocation9], 128, 128, 8
    $region37: #{tpu_custom_call.1} parent=1 // pred_fallthru
      _
    // Predicated region
    $region38: #{tpu_custom_call.1} parent=1 // pred_check
      _
    $region39: #{tpu_custom_call.1} parent=1 // pred_check_branch
      %67 = sbr.rel (0) target = $region41
    $region40: #{tpu_custom_call.1} parent=1 // pred_region
      _
    $region41: #{tpu_custom_call.1} parent=1 // pred_fallthru
      _
    // Predicated region
    $region42: #{tpu_custom_call.1} parent=1 // pred_check
      _
    $region43: #{tpu_custom_call.1} parent=1 // pred_check_branch
      %69 = sbr.rel (0) target = $region45
    $region44: #{tpu_custom_call.1} parent=1 // pred_region
      %70 = dma.done [#allocation6], 256
    $region45: #{tpu_custom_call.1} parent=1 // pred_fallthru
      _
    // Predicated region
    $region46: #{tpu_custom_call.1} parent=1 // pred_check
      _
    $region47: #{tpu_custom_call.1} parent=1 // pred_check_branch
      %72 = sbr.rel (0) target = $region49
    $region48: #{tpu_custom_call.1} parent=1 // pred_region
      %73 = dma.done [#allocation9], 256
    $region49: #{tpu_custom_call.1} parent=1 // pred_fallthru
      _
    // Predicated region
    $region50: #{tpu_custom_call.1} parent=1 // pred_check
      _
    $region51: #{tpu_custom_call.1} parent=1 // pred_check_branch
      %75 = sbr.rel (0) target = $region53
    $region52: #{tpu_custom_call.1} parent=1 // pred_region
      %76 = dma.done [#allocation9], 512
    $region53: #{tpu_custom_call.1} parent=1 // pred_fallthru
      _
    %v77 = vld [vmem:[%s0] sm:$0xff]
    %v78 = vld [vmem:[%s0 + $0x8] sm:$0xff]
    %v79 = vld [vmem:[%s0 + $0x10] sm:$0xff]
    %v80 = vld [vmem:[%s0 + $0x18] sm:$0xff]
    %v81 = vld [vmem:[%s0 + $0x20] sm:$0xff]
    %v82 = vld [vmem:[%s0 + $0x28] sm:$0xff]
    %v83 = vld [vmem:[%s0 + $0x30] sm:$0xff]
    %v84 = vld [vmem:[%s0 + $0x38] sm:$0xff]
    %v85 = vld [vmem:[#allocation5] sm:$0xff]
    %v86 = vld [vmem:[#allocation5 + $0x8] sm:$0xff]
    %v87 = vld [vmem:[%s5] sm:$0x1]
    %v89 = vlaneseq
    %v90 = vshrl.u32 %v89, 7
    %v91 = vsub.s32 0, %v90
    %v92 = vrot.slane %v87, %v91
    %vm94 = vcmask 130048
    %v96 = vsel %vm94, %v77, 0
    %v99 = vsel %vm94, %v78, 0
    %v102 = vsel %vm94, %v79, 0
    %v105 = vsel %vm94, %v80, 0
    %v108 = vsel %vm94, %v81, 0
    %v111 = vsel %vm94, %v82, 0
    %v114 = vsel %vm94, %v83, 0
    %v117 = vsel %vm94, %v84, 0
    %119 = vmatprep.subr.mxu0 0.0
    %120 = vmatpush1.msra.mxu0 %v85
    %121 = vmatprep.subr.mxu0 0.0
    %122 = vmatpush1.msra.mxu0 %v86
    %123 = vmatprep.subr.mxu0 0.0
    %124 = vmatpush1.msra.mxu0 0.0
    %125 = vmatprep.subr.mxu0 0.0
    %126 = vmatpush1.msra.mxu0 0.0
    %127 = vmatprep.subr.mxu0 0.0
    %128 = vmatpush1.msra.mxu0 0.0
    %129 = vmatprep.subr.mxu0 0.0
    %130 = vmatpush1.msra.mxu0 0.0
    %131 = vmatprep.subr.mxu0 0.0
    %132 = vmatpush1.msra.mxu0 0.0
    %133 = vmatprep.subr.mxu0 0.0
    %134 = vmatpush1.msra.mxu0 0.0
    %135 = vmatprep.subr.mxu0 0.0
    %136 = vmatpush1.msra.mxu0 0.0
    %137 = vmatprep.subr.mxu0 0.0
    %138 = vmatpush1.msra.mxu0 0.0
    %139 = vmatprep.subr.mxu0 0.0
    %140 = vmatpush1.msra.mxu0 0.0
    %141 = vmatprep.subr.mxu0 0.0
    %142 = vmatpush1.msra.mxu0 0.0
    %143 = vmatprep.subr.mxu0 0.0
    %144 = vmatpush1.msra.mxu0 0.0
    %145 = vmatprep.subr.mxu0 0.0
    %146 = vmatpush1.msra.mxu0 0.0
    %147 = vmatprep.subr.mxu0 0.0
    %148 = vmatpush1.msra.mxu0 0.0
    %149 = vmatprep.subr.mxu0 0.0
    %150 = vmatpush1.msra.mxu0 0.0
    %151 = vmatprep.subr.mxu0 0.0
    %152 = vmatpush1.msra.mxu0 0.0
    %153 = vmatprep.subr.mxu0 0.0
    %154 = vmatpush1.msra.mxu0 0.0
    %155 = vmatprep.subr.mxu0 0.0
    %156 = vmatpush1.msra.mxu0 0.0
    %157 = vmatprep.subr.mxu0 0.0
    %158 = vmatpush1.msra.mxu0 0.0
    %159 = vmatprep.subr.mxu0 0.0
    %160 = vmatpush1.msra.mxu0 0.0
    %161 = vmatprep.subr.mxu0 0.0
    %162 = vmatpush1.msra.mxu0 0.0
    %163 = vmatprep.subr.mxu0 0.0
    %164 = vmatpush1.msra.mxu0 0.0
    %165 = vmatprep.subr.mxu0 0.0
    %166 = vmatpush1.msra.mxu0 0.0
    %167 = vmatprep.subr.mxu0 0.0
    %168 = vmatpush1.msra.mxu0 0.0
    %169 = vmatprep.subr.mxu0 0.0
    %170 = vmatpush1.msra.mxu0 0.0
    %171 = vmatprep.subr.mxu0 0.0
    %172 = vmatpush1.msra.mxu0 0.0
    %173 = vmatprep.subr.mxu0 0.0
    %174 = vmatpush1.msra.mxu0 0.0
    %175 = vmatprep.subr.mxu0 0.0
    %176 = vmatpush1.msra.mxu0 0.0
    %177 = vmatprep.subr.mxu0 0.0
    %178 = vmatpush1.msra.mxu0 0.0
    %179 = vmatprep.subr.mxu0 0.0
    %180 = vmatpush1.msra.mxu0 0.0
    %181 = vmatprep.subr.mxu0 0.0
    %182 = vmatpush1.msra.mxu0 0.0
    %183 = vmatprep.mubr.f32.mxu0 0.0
    %184 = vmatmul.mubr.f32.gmra.mrb[0].mxu0 %v96
    %v185 = vpop.f32.mrb[0].mxu0
    %v186 = vadd.f32 %v92, %v185
    %v187 = vpop.f32.mrb[0].mxu0
    %188 = vmatprep.mubr.f32.mxu0 0.0
    %189 = vmatmul.mubr.f32.gmra.mrb[0].mxu0 %v99
    %v190 = vpop.f32.mrb[0].mxu0
    %v191 = vadd.f32 %v92, %v190
    %v192 = vpop.f32.mrb[0].mxu0
    %193 = vmatprep.mubr.f32.mxu0 0.0
    %194 = vmatmul.mubr.f32.gmra.mrb[0].mxu0 %v102
    %v195 = vpop.f32.mrb[0].mxu0
    %v196 = vadd.f32 %v92, %v195
    %v197 = vpop.f32.mrb[0].mxu0
    %198 = vmatprep.mubr.f32.mxu0 0.0
    %199 = vmatmul.mubr.f32.gmra.mrb[0].mxu0 %v105
    %v200 = vpop.f32.mrb[0].mxu0
    %v201 = vadd.f32 %v92, %v200
    %v202 = vpop.f32.mrb[0].mxu0
    %203 = vmatprep.mubr.f32.mxu0 0.0
    %204 = vmatmul.mubr.f32.gmra.mrb[0].mxu0 %v108
    %v205 = vpop.f32.mrb[0].mxu0
    %v206 = vadd.f32 %v92, %v205
    %v207 = vpop.f32.mrb[0].mxu0
    %208 = vmatprep.mubr.f32.mxu0 0.0
    %209 = vmatmul.mubr.f32.gmra.mrb[0].mxu0 %v111
    %v210 = vpop.f32.mrb[0].mxu0
    %v211 = vadd.f32 %v92, %v210
    %v212 = vpop.f32.mrb[0].mxu0
    %213 = vmatprep.mubr.f32.mxu0 0.0
    %214 = vmatmul.mubr.f32.gmra.mrb[0].mxu0 %v114
    %v215 = vpop.f32.mrb[0].mxu0
    %v216 = vadd.f32 %v92, %v215
    %v217 = vpop.f32.mrb[0].mxu0
    %218 = vmatprep.mubr.f32.mxu0 0.0
    %219 = vmatmul.mubr.f32.gmra.mrb[0].mxu0 %v117
    %v220 = vpop.f32.mrb[0].mxu0
    %v221 = vadd.f32 %v92, %v220
    %v222 = vpop.f32.mrb[0].mxu0
    %223 = vdwg.mxu0
    %v224 = vld [vmem:[%s1] sm:$0xff]
    %v225 = vld [vmem:[%s1 + $0x8] sm:$0xff]
    %v226 = vld [vmem:[%s1 + $0x10] sm:$0xff]
    %v227 = vld [vmem:[%s1 + $0x18] sm:$0xff]
    %v228 = vld [vmem:[%s1 + $0x20] sm:$0xff]
    %v229 = vld [vmem:[%s1 + $0x28] sm:$0xff]
    %v230 = vld [vmem:[%s1 + $0x30] sm:$0xff]
    %v231 = vld [vmem:[%s1 + $0x38] sm:$0xff]
    %v232 = vld [vmem:[#allocation8] sm:$0xff]
    %v233 = vld [vmem:[#allocation8 + $0x8] sm:$0xff]
    %v234 = vld [vmem:[%s6] sm:$0x1]
    %v236 = vlaneseq
    %v237 = vshrl.u32 %v236, 7
    %v238 = vsub.s32 0, %v237
    %v239 = vrot.slane %v234, %v238
    %v242 = vsel %vm94, %v224, 0
    %v245 = vsel %vm94, %v225, 0
    %v248 = vsel %vm94, %v226, 0
    %v251 = vsel %vm94, %v227, 0
    %v254 = vsel %vm94, %v228, 0
    %v257 = vsel %vm94, %v229, 0
    %v260 = vsel %vm94, %v230, 0
    %v263 = vsel %vm94, %v231, 0
    %265 = vmatprep.subr.mxu0 0.0
    %266 = vmatpush1.msra.mxu0 %v232
    %267 = vmatprep.subr.mxu0 0.0
    %268 = vmatpush1.msra.mxu0 %v233
    %269 = vmatprep.subr.mxu0 0.0
    %270 = vmatpush1.msra.mxu0 0.0
    %271 = vmatprep.subr.mxu0 0.0
    %272 = vmatpush1.msra.mxu0 0.0
    %273 = vmatprep.subr.mxu0 0.0
    %274 = vmatpush1.msra.mxu0 0.0
    %275 = vmatprep.subr.mxu0 0.0
    %276 = vmatpush1.msra.mxu0 0.0
    %277 = vmatprep.subr.mxu0 0.0
    %278 = vmatpush1.msra.mxu0 0.0
    %279 = vmatprep.subr.mxu0 0.0
    %280 = vmatpush1.msra.mxu0 0.0
    %281 = vmatprep.subr.mxu0 0.0
    %282 = vmatpush1.msra.mxu0 0.0
    %283 = vmatprep.subr.mxu0 0.0
    %284 = vmatpush1.msra.mxu0 0.0
    %285 = vmatprep.subr.mxu0 0.0
    %286 = vmatpush1.msra.mxu0 0.0
    %287 = vmatprep.subr.mxu0 0.0
    %288 = vmatpush1.msra.mxu0 0.0
    %289 = vmatprep.subr.mxu0 0.0
    %290 = vmatpush1.msra.mxu0 0.0
    %291 = vmatprep.subr.mxu0 0.0
    %292 = vmatpush1.msra.mxu0 0.0
    %293 = vmatprep.subr.mxu0 0.0
    %294 = vmatpush1.msra.mxu0 0.0
    %295 = vmatprep.subr.mxu0 0.0
    %296 = vmatpush1.msra.mxu0 0.0
    %297 = vmatprep.subr.mxu0 0.0
    %298 = vmatpush1.msra.mxu0 0.0
    %299 = vmatprep.subr.mxu0 0.0
    %300 = vmatpush1.msra.mxu0 0.0
    %301 = vmatprep.subr.mxu0 0.0
    %302 = vmatpush1.msra.mxu0 0.0
    %303 = vmatprep.subr.mxu0 0.0
    %304 = vmatpush1.msra.mxu0 0.0
    %305 = vmatprep.subr.mxu0 0.0
    %306 = vmatpush1.msra.mxu0 0.0
    %307 = vmatprep.subr.mxu0 0.0
    %308 = vmatpush1.msra.mxu0 0.0
    %309 = vmatprep.subr.mxu0 0.0
    %310 = vmatpush1.msra.mxu0 0.0
    %311 = vmatprep.subr.mxu0 0.0
    %312 = vmatpush1.msra.mxu0 0.0
    %313 = vmatprep.subr.mxu0 0.0
    %314 = vmatpush1.msra.mxu0 0.0
    %315 = vmatprep.subr.mxu0 0.0
    %316 = vmatpush1.msra.mxu0 0.0
    %317 = vmatprep.subr.mxu0 0.0
    %318 = vmatpush1.msra.mxu0 0.0
    %319 = vmatprep.subr.mxu0 0.0
    %320 = vmatpush1.msra.mxu0 0.0
    %321 = vmatprep.subr.mxu0 0.0
    %322 = vmatpush1.msra.mxu0 0.0
    %323 = vmatprep.subr.mxu0 0.0
    %324 = vmatpush1.msra.mxu0 0.0
    %325 = vmatprep.subr.mxu0 0.0
    %326 = vmatpush1.msra.mxu0 0.0
    %327 = vmatprep.subr.mxu0 0.0
    %328 = vmatpush1.msra.mxu0 0.0
    %329 = vmatprep.mubr.f32.mxu0 0.0
    %330 = vmatmul.mubr.f32.gmra.mrb[0].mxu0 %v242
    %v331 = vpop.f32.mrb[0].mxu0
    %v332 = vadd.f32 %v239, %v331
    %v333 = vpop.f32.mrb[0].mxu0
    %334 = vmatprep.mubr.f32.mxu0 0.0
    %335 = vmatmul.mubr.f32.gmra.mrb[0].mxu0 %v245
    %v336 = vpop.f32.mrb[0].mxu0
    %v337 = vadd.f32 %v239, %v336
    %v338 = vpop.f32.mrb[0].mxu0
    %339 = vmatprep.mubr.f32.mxu0 0.0
    %340 = vmatmul.mubr.f32.gmra.mrb[0].mxu0 %v248
    %v341 = vpop.f32.mrb[0].mxu0
    %v342 = vadd.f32 %v239, %v341
    %v343 = vpop.f32.mrb[0].mxu0
    %344 = vmatprep.mubr.f32.mxu0 0.0
    %345 = vmatmul.mubr.f32.gmra.mrb[0].mxu0 %v251
    %v346 = vpop.f32.mrb[0].mxu0
    %v347 = vadd.f32 %v239, %v346
    %v348 = vpop.f32.mrb[0].mxu0
    %349 = vmatprep.mubr.f32.mxu0 0.0
    %350 = vmatmul.mubr.f32.gmra.mrb[0].mxu0 %v254
    %v351 = vpop.f32.mrb[0].mxu0
    %v352 = vadd.f32 %v239, %v351
    %v353 = vpop.f32.mrb[0].mxu0
    %354 = vmatprep.mubr.f32.mxu0 0.0
    %355 = vmatmul.mubr.f32.gmra.mrb[0].mxu0 %v257
    %v356 = vpop.f32.mrb[0].mxu0
    %v357 = vadd.f32 %v239, %v356
    %v358 = vpop.f32.mrb[0].mxu0
    %359 = vmatprep.mubr.f32.mxu0 0.0
    %360 = vmatmul.mubr.f32.gmra.mrb[0].mxu0 %v260
    %v361 = vpop.f32.mrb[0].mxu0
    %v362 = vadd.f32 %v239, %v361
    %v363 = vpop.f32.mrb[0].mxu0
    %364 = vmatprep.mubr.f32.mxu0 0.0
    %365 = vmatmul.mubr.f32.gmra.mrb[0].mxu0 %v263
    %v366 = vpop.f32.mrb[0].mxu0
    %v367 = vadd.f32 %v239, %v366
    %v368 = vpop.f32.mrb[0].mxu0
    %369 = vdwg.mxu0
    %vm370 = vcmask 261120
    %371 = vst.msk [vmem:[#allocation2] sm:$0xff] %vm370, %v186
    %372 = vst.msk [vmem:[#allocation2 + $0x10] sm:$0xff] %vm370, %v191
    %373 = vst.msk [vmem:[#allocation2 + $0x20] sm:$0xff] %vm370, %v196
    %374 = vst.msk [vmem:[#allocation2 + $0x30] sm:$0xff] %vm370, %v201
    %375 = vst.msk [vmem:[#allocation2 + $0x40] sm:$0xff] %vm370, %v206
    %376 = vst.msk [vmem:[#allocation2 + $0x50] sm:$0xff] %vm370, %v211
    %377 = vst.msk [vmem:[#allocation2 + $0x60] sm:$0xff] %vm370, %v216
    %378 = vst.msk [vmem:[#allocation2 + $0x70] sm:$0xff] %vm370, %v221
    %387 = vrot.lane.b32.xlu0 %v332, 32
    %v388 = vpop.permute.xlu0 %387
    %389 = vrot.lane.b32.xlu0 %v337, 32
    %v390 = vpop.permute.xlu0 %389
    %391 = vrot.lane.b32.xlu0 %v342, 32
    %v392 = vpop.permute.xlu0 %391
    %393 = vrot.lane.b32.xlu0 %v347, 32
    %v394 = vpop.permute.xlu0 %393
    %395 = vrot.lane.b32.xlu0 %v352, 32
    %v396 = vpop.permute.xlu0 %395
    %397 = vrot.lane.b32.xlu0 %v357, 32
    %v398 = vpop.permute.xlu0 %397
    %399 = vrot.lane.b32.xlu0 %v362, 32
    %v400 = vpop.permute.xlu0 %399
    %401 = vrot.lane.b32.xlu0 %v367, 32
    %v402 = vpop.permute.xlu0 %401
    %vm411 = vcmask 523520
    %412 = vst.msk [vmem:[#allocation2] sm:$0xff] %vm411, %v388
    %413 = vst.msk [vmem:[#allocation2 + $0x10] sm:$0xff] %vm411, %v390
    %414 = vst.msk [vmem:[#allocation2 + $0x20] sm:$0xff] %vm411, %v392
    %415 = vst.msk [vmem:[#allocation2 + $0x30] sm:$0xff] %vm411, %v394
    %416 = vst.msk [vmem:[#allocation2 + $0x40] sm:$0xff] %vm411, %v396
    %417 = vst.msk [vmem:[#allocation2 + $0x50] sm:$0xff] %vm411, %v398
    %418 = vst.msk [vmem:[#allocation2 + $0x60] sm:$0xff] %vm411, %v400
    %419 = vst.msk [vmem:[#allocation2 + $0x70] sm:$0xff] %vm411, %v402
    %428 = vrot.lane.b32.xlu0 %v186, 32
    %v429 = vpop.permute.xlu0 %428
    %430 = vrot.lane.b32.xlu0 %v191, 32
    %v431 = vpop.permute.xlu0 %430
    %432 = vrot.lane.b32.xlu0 %v196, 32
    %v433 = vpop.permute.xlu0 %432
    %434 = vrot.lane.b32.xlu0 %v201, 32
    %v435 = vpop.permute.xlu0 %434
    %436 = vrot.lane.b32.xlu0 %v206, 32
    %v437 = vpop.permute.xlu0 %436
    %438 = vrot.lane.b32.xlu0 %v211, 32
    %v439 = vpop.permute.xlu0 %438
    %440 = vrot.lane.b32.xlu0 %v216, 32
    %v441 = vpop.permute.xlu0 %440
    %442 = vrot.lane.b32.xlu0 %v221, 32
    %v443 = vpop.permute.xlu0 %442
    %vm452 = vcmask 785920
    %453 = vst.msk [vmem:[#allocation2] sm:$0xff] %vm452, %v429
    %454 = vst.msk [vmem:[#allocation2 + $0x10] sm:$0xff] %vm452, %v431
    %455 = vst.msk [vmem:[#allocation2 + $0x20] sm:$0xff] %vm452, %v433
    %456 = vst.msk [vmem:[#allocation2 + $0x30] sm:$0xff] %vm452, %v435
    %457 = vst.msk [vmem:[#allocation2 + $0x40] sm:$0xff] %vm452, %v437
    %458 = vst.msk [vmem:[#allocation2 + $0x50] sm:$0xff] %vm452, %v439
    %459 = vst.msk [vmem:[#allocation2 + $0x60] sm:$0xff] %vm452, %v441
    %460 = vst.msk [vmem:[#allocation2 + $0x70] sm:$0xff] %vm452, %v443
    %461 = vrot.lane.b32.xlu0 %v332, 64
    %v462 = vpop.permute.xlu0 %461
    %463 = vrot.lane.b32.xlu0 %v337, 64
    %v464 = vpop.permute.xlu0 %463
    %465 = vrot.lane.b32.xlu0 %v342, 64
    %v466 = vpop.permute.xlu0 %465
    %467 = vrot.lane.b32.xlu0 %v347, 64
    %v468 = vpop.permute.xlu0 %467
    %469 = vrot.lane.b32.xlu0 %v352, 64
    %v470 = vpop.permute.xlu0 %469
    %471 = vrot.lane.b32.xlu0 %v357, 64
    %v472 = vpop.permute.xlu0 %471
    %473 = vrot.lane.b32.xlu0 %v362, 64
    %v474 = vpop.permute.xlu0 %473
    %475 = vrot.lane.b32.xlu0 %v367, 64
    %v476 = vpop.permute.xlu0 %475
    %vm485 = vcmask 1048320
    %486 = vst.msk [vmem:[#allocation2] sm:$0xff] %vm485, %v462
    %487 = vst.msk [vmem:[#allocation2 + $0x10] sm:$0xff] %vm485, %v464
    %488 = vst.msk [vmem:[#allocation2 + $0x20] sm:$0xff] %vm485, %v466
    %489 = vst.msk [vmem:[#allocation2 + $0x30] sm:$0xff] %vm485, %v468
    %490 = vst.msk [vmem:[#allocation2 + $0x40] sm:$0xff] %vm485, %v470
    %491 = vst.msk [vmem:[#allocation2 + $0x50] sm:$0xff] %vm485, %v472
    %492 = vst.msk [vmem:[#allocation2 + $0x60] sm:$0xff] %vm485, %v474
    %493 = vst.msk [vmem:[#allocation2 + $0x70] sm:$0xff] %vm485, %v476
    %494 = vrot.lane.b32.xlu0 %v186, 64
    %v495 = vpop.permute.xlu0 %494
    %496 = vrot.lane.b32.xlu0 %v191, 64
    %v497 = vpop.permute.xlu0 %496
    %498 = vrot.lane.b32.xlu0 %v196, 64
    %v499 = vpop.permute.xlu0 %498
    %500 = vrot.lane.b32.xlu0 %v201, 64
    %v501 = vpop.permute.xlu0 %500
    %502 = vrot.lane.b32.xlu0 %v206, 64
    %v503 = vpop.permute.xlu0 %502
    %504 = vrot.lane.b32.xlu0 %v211, 64
    %v505 = vpop.permute.xlu0 %504
    %506 = vrot.lane.b32.xlu0 %v216, 64
    %v507 = vpop.permute.xlu0 %506
    %508 = vrot.lane.b32.xlu0 %v221, 64
    %v509 = vpop.permute.xlu0 %508
    %518 = vst.msk [vmem:[#allocation2 + $0x8] sm:$0xff] %vm370, %v495
    %519 = vst.msk [vmem:[#allocation2 + $0x18] sm:$0xff] %vm370, %v497
    %520 = vst.msk [vmem:[#allocation2 + $0x28] sm:$0xff] %vm370, %v499
    %521 = vst.msk [vmem:[#allocation2 + $0x38] sm:$0xff] %vm370, %v501
    %522 = vst.msk [vmem:[#allocation2 + $0x48] sm:$0xff] %vm370, %v503
    %523 = vst.msk [vmem:[#allocation2 + $0x58] sm:$0xff] %vm370, %v505
    %524 = vst.msk [vmem:[#allocation2 + $0x68] sm:$0xff] %vm370, %v507
    %525 = vst.msk [vmem:[#allocation2 + $0x78] sm:$0xff] %vm370, %v509
    %526 = vrot.lane.b32.xlu0 %v332, 96
    %v527 = vpop.permute.xlu0 %526
    %528 = vrot.lane.b32.xlu0 %v337, 96
    %v529 = vpop.permute.xlu0 %528
    %530 = vrot.lane.b32.xlu0 %v342, 96
    %v531 = vpop.permute.xlu0 %530
    %532 = vrot.lane.b32.xlu0 %v347, 96
    %v533 = vpop.permute.xlu0 %532
    %534 = vrot.lane.b32.xlu0 %v352, 96
    %v535 = vpop.permute.xlu0 %534
    %536 = vrot.lane.b32.xlu0 %v357, 96
    %v537 = vpop.permute.xlu0 %536
    %538 = vrot.lane.b32.xlu0 %v362, 96
    %v539 = vpop.permute.xlu0 %538
    %540 = vrot.lane.b32.xlu0 %v367, 96
    %v541 = vpop.permute.xlu0 %540
    %550 = vst.msk [vmem:[#allocation2 + $0x8] sm:$0xff] %vm411, %v527
    %551 = vst.msk [vmem:[#allocation2 + $0x18] sm:$0xff] %vm411, %v529
    %552 = vst.msk [vmem:[#allocation2 + $0x28] sm:$0xff] %vm411, %v531
    %553 = vst.msk [vmem:[#allocation2 + $0x38] sm:$0xff] %vm411, %v533
    %554 = vst.msk [vmem:[#allocation2 + $0x48] sm:$0xff] %vm411, %v535
    %555 = vst.msk [vmem:[#allocation2 + $0x58] sm:$0xff] %vm411, %v537
    %556 = vst.msk [vmem:[#allocation2 + $0x68] sm:$0xff] %vm411, %v539
    %557 = vst.msk [vmem:[#allocation2 + $0x78] sm:$0xff] %vm411, %v541
    %558 = vrot.lane.b32.xlu0 %v186, 96
    %v559 = vpop.permute.xlu0 %558
    %560 = vrot.lane.b32.xlu0 %v191, 96
    %v561 = vpop.permute.xlu0 %560
    %562 = vrot.lane.b32.xlu0 %v196, 96
    %v563 = vpop.permute.xlu0 %562
    %564 = vrot.lane.b32.xlu0 %v201, 96
    %v565 = vpop.permute.xlu0 %564
    %566 = vrot.lane.b32.xlu0 %v206, 96
    %v567 = vpop.permute.xlu0 %566
    %568 = vrot.lane.b32.xlu0 %v211, 96
    %v569 = vpop.permute.xlu0 %568
    %570 = vrot.lane.b32.xlu0 %v216, 96
    %v571 = vpop.permute.xlu0 %570
    %572 = vrot.lane.b32.xlu0 %v221, 96
    %v573 = vpop.permute.xlu0 %572
    %582 = vst.msk [vmem:[#allocation2 + $0x8] sm:$0xff] %vm452, %v559
    %583 = vst.msk [vmem:[#allocation2 + $0x18] sm:$0xff] %vm452, %v561
    %584 = vst.msk [vmem:[#allocation2 + $0x28] sm:$0xff] %vm452, %v563
    %585 = vst.msk [vmem:[#allocation2 + $0x38] sm:$0xff] %vm452, %v565
    %586 = vst.msk [vmem:[#allocation2 + $0x48] sm:$0xff] %vm452, %v567
    %587 = vst.msk [vmem:[#allocation2 + $0x58] sm:$0xff] %vm452, %v569
    %588 = vst.msk [vmem:[#allocation2 + $0x68] sm:$0xff] %vm452, %v571
    %589 = vst.msk [vmem:[#allocation2 + $0x78] sm:$0xff] %vm452, %v573
    %590 = vst.msk [vmem:[#allocation2 + $0x8] sm:$0xff] %vm485, %v332
    %591 = vst.msk [vmem:[#allocation2 + $0x18] sm:$0xff] %vm485, %v337
    %592 = vst.msk [vmem:[#allocation2 + $0x28] sm:$0xff] %vm485, %v342
    %593 = vst.msk [vmem:[#allocation2 + $0x38] sm:$0xff] %vm485, %v347
    %594 = vst.msk [vmem:[#allocation2 + $0x48] sm:$0xff] %vm485, %v352
    %595 = vst.msk [vmem:[#allocation2 + $0x58] sm:$0xff] %vm485, %v357
    %596 = vst.msk [vmem:[#allocation2 + $0x68] sm:$0xff] %vm485, %v362
    %597 = vst.msk [vmem:[#allocation2 + $0x78] sm:$0xff] %vm485, %v367
    %v598 = vld [vmem:[%s4] sm:$0xff]
    %v599 = vld [vmem:[%s4 + $0x8] sm:$0xff]
    %v600 = vld [vmem:[%s4 + $0x10] sm:$0xff]
    %v601 = vld [vmem:[%s4 + $0x18] sm:$0xff]
    %v602 = vld [vmem:[%s4 + $0x20] sm:$0xff]
    %v603 = vld [vmem:[%s4 + $0x28] sm:$0xff]
    %v604 = vld [vmem:[%s4 + $0x30] sm:$0xff]
    %v605 = vld [vmem:[%s4 + $0x38] sm:$0xff]
    %v606 = vld [vmem:[%s4 + $0x40] sm:$0xff]
    %v607 = vld [vmem:[%s4 + $0x48] sm:$0xff]
    %v608 = vld [vmem:[%s4 + $0x50] sm:$0xff]
    %v609 = vld [vmem:[%s4 + $0x58] sm:$0xff]
    %v610 = vld [vmem:[%s4 + $0x60] sm:$0xff]
    %v611 = vld [vmem:[%s4 + $0x68] sm:$0xff]
    %v612 = vld [vmem:[%s4 + $0x70] sm:$0xff]
    %v613 = vld [vmem:[%s4 + $0x78] sm:$0xff]
    %s614 = smul.u32 0, 2
    %s615 = smul.addr %s614, 8
    %s616 = scalar_lea.vmem [#allocation2], %s615
    %v617 = vld [vmem:[%s616] sm:$0xff]
    %v618 = vld [vmem:[%s616 + $0x8] sm:$0xff]
    %vm619 = vcmask 523264
    %v621 = vsel %vm619, 0.0, 0
    %623 = vmatprep.subr.mxu0 %v599
    %624 = vmatpush1.msra.mxu0 %v598
    %625 = vmatprep.subr.mxu0 %v601
    %626 = vmatpush1.msra.mxu0 %v600
    %627 = vmatprep.subr.mxu0 %v603
    %628 = vmatpush1.msra.mxu0 %v602
    %629 = vmatprep.subr.mxu0 %v605
    %630 = vmatpush1.msra.mxu0 %v604
    %631 = vmatprep.subr.mxu0 %v607
    %632 = vmatpush1.msra.mxu0 %v606
    %633 = vmatprep.subr.mxu0 %v609
    %634 = vmatpush1.msra.mxu0 %v608
    %635 = vmatprep.subr.mxu0 %v611
    %636 = vmatpush1.msra.mxu0 %v610
    %637 = vmatprep.subr.mxu0 %v613
    %638 = vmatpush1.msra.mxu0 %v612
    %639 = vmatprep.subr.mxu0 0.0
    %640 = vmatpush1.msra.mxu0 0.0
    %641 = vmatprep.subr.mxu0 0.0
    %642 = vmatpush1.msra.mxu0 0.0
    %643 = vmatprep.subr.mxu0 0.0
    %644 = vmatpush1.msra.mxu0 0.0
    %645 = vmatprep.subr.mxu0 0.0
    %646 = vmatpush1.msra.mxu0 0.0
    %647 = vmatprep.subr.mxu0 0.0
    %648 = vmatpush1.msra.mxu0 0.0
    %649 = vmatprep.subr.mxu0 0.0
    %650 = vmatpush1.msra.mxu0 0.0
    %651 = vmatprep.subr.mxu0 0.0
    %652 = vmatpush1.msra.mxu0 0.0
    %653 = vmatprep.subr.mxu0 0.0
    %654 = vmatpush1.msra.mxu0 0.0
    %655 = vmatprep.subr.mxu0 0.0
    %656 = vmatpush1.msra.mxu0 0.0
    %657 = vmatprep.subr.mxu0 0.0
    %658 = vmatpush1.msra.mxu0 0.0
    %659 = vmatprep.subr.mxu0 0.0
    %660 = vmatpush1.msra.mxu0 0.0
    %661 = vmatprep.subr.mxu0 0.0
    %662 = vmatpush1.msra.mxu0 0.0
    %663 = vmatprep.subr.mxu0 0.0
    %664 = vmatpush1.msra.mxu0 0.0
    %665 = vmatprep.subr.mxu0 0.0
    %666 = vmatpush1.msra.mxu0 0.0
    %667 = vmatprep.subr.mxu0 0.0
    %668 = vmatpush1.msra.mxu0 0.0
    %669 = vmatprep.subr.mxu0 0.0
    %670 = vmatpush1.msra.mxu0 0.0
    %671 = vmatprep.subr.mxu0 0.0
    %672 = vmatpush1.msra.mxu0 0.0
    %673 = vmatprep.subr.mxu0 0.0
    %674 = vmatpush1.msra.mxu0 0.0
    %675 = vmatprep.subr.mxu0 0.0
    %676 = vmatpush1.msra.mxu0 0.0
    %677 = vmatprep.subr.mxu0 0.0
    %678 = vmatpush1.msra.mxu0 0.0
    %679 = vmatprep.subr.mxu0 0.0
    %680 = vmatpush1.msra.mxu0 0.0
    %681 = vmatprep.subr.mxu0 0.0
    %682 = vmatpush1.msra.mxu0 0.0
    %683 = vmatprep.subr.mxu0 0.0
    %684 = vmatpush1.msra.mxu0 0.0
    %685 = vmatprep.subr.mxu0 0.0
    %686 = vmatpush1.msra.mxu0 0.0
    %687 = vmatprep.mubr.f32.mxu0 0.0
    %688 = vmatmul.mubr.f32.gmra.mrb[0].mxu0 %v621
    %v689 = vpop.f32.mrb[0].mxu0
    %v690 = vadd.f32 %v617, %v689
    %v691 = vpop.f32.mrb[0].mxu0
    %v692 = vadd.f32 %v618, %v691
    %693 = vdwg.mxu0
    %v694 = vmul.f32 %v690, 0.5
    %v695 = vtanh.pop %v694
    %v696 = vmul.f32 %v695, 0.5
    %v697 = vadd.f32 %v696, 0.5
    %v698 = vtanh.pop %v692
    %v699 = vmul.f32 %v692, 0.5
    %v700 = vtanh.pop %v699
    %v701 = vmul.f32 %v700, 0.5
    %v702 = vadd.f32 %v701, 0.5
    %v703 = vmul.f32 %v697, 0.0
    %v704 = vmul.f32 %v697, %v698
    %706 = vrot.lane.b32.xlu0 %v704, 64
    %v707 = vpop.permute.xlu0 %706
    %v709 = vadd.f32 %v703, %v707
    %v710 = vtanh.pop %v709
    %v711 = vmul.f32 %v702, %v710
    %713 = vrot.lane.b32.xlu0 %v711, 64
    %v714 = vpop.permute.xlu0 %713
    %716 = vst.msk [vmem:[#allocation3] sm:$0xff] %vm370, %v714
    %717 = vrot.lane.b32.xlu0 %v711, 32
    %v718 = vpop.permute.xlu0 %717
    %s720 = scalar_lea.vmem [#allocation4], 56
    %721 = vst.msk [vmem:[%s720] sm:$0xff] %vm370, %v718
    %s722 = smul.u32 1, 2
    %s723 = smul.addr %s722, 8
    %s724 = scalar_lea.vmem [#allocation2], %s723
    %v725 = vld [vmem:[%s724] sm:$0xff]
    %v726 = vld [vmem:[%s724 + $0x8] sm:$0xff]
    %v727 = vsel %vm619, %v714, 0
    %729 = vmatprep.subr.mxu0 %v599
    %730 = vmatpush1.msra.mxu0 %v598
    %731 = vmatprep.subr.mxu0 %v601
    %732 = vmatpush1.msra.mxu0 %v600
    %733 = vmatprep.subr.mxu0 %v603
    %734 = vmatpush1.msra.mxu0 %v602
    %735 = vmatprep.subr.mxu0 %v605
    %736 = vmatpush1.msra.mxu0 %v604
    %737 = vmatprep.subr.mxu0 %v607
    %738 = vmatpush1.msra.mxu0 %v606
    %739 = vmatprep.subr.mxu0 %v609
    %740 = vmatpush1.msra.mxu0 %v608
    %741 = vmatprep.subr.mxu0 %v611
    %742 = vmatpush1.msra.mxu0 %v610
    %743 = vmatprep.subr.mxu0 %v613
    %744 = vmatpush1.msra.mxu0 %v612
    %745 = vmatprep.subr.mxu0 0.0
    %746 = vmatpush1.msra.mxu0 0.0
    %747 = vmatprep.subr.mxu0 0.0
    %748 = vmatpush1.msra.mxu0 0.0
    %749 = vmatprep.subr.mxu0 0.0
    %750 = vmatpush1.msra.mxu0 0.0
    %751 = vmatprep.subr.mxu0 0.0
    %752 = vmatpush1.msra.mxu0 0.0
    %753 = vmatprep.subr.mxu0 0.0
    %754 = vmatpush1.msra.mxu0 0.0
    %755 = vmatprep.subr.mxu0 0.0
    %756 = vmatpush1.msra.mxu0 0.0
    %757 = vmatprep.subr.mxu0 0.0
    %758 = vmatpush1.msra.mxu0 0.0
    %759 = vmatprep.subr.mxu0 0.0
    %760 = vmatpush1.msra.mxu0 0.0
    %761 = vmatprep.subr.mxu0 0.0
    %762 = vmatpush1.msra.mxu0 0.0
    %763 = vmatprep.subr.mxu0 0.0
    %764 = vmatpush1.msra.mxu0 0.0
    %765 = vmatprep.subr.mxu0 0.0
    %766 = vmatpush1.msra.mxu0 0.0
    %767 = vmatprep.subr.mxu0 0.0
    %768 = vmatpush1.msra.mxu0 0.0
    %769 = vmatprep.subr.mxu0 0.0
    %770 = vmatpush1.msra.mxu0 0.0
    %771 = vmatprep.subr.mxu0 0.0
    %772 = vmatpush1.msra.mxu0 0.0
    %773 = vmatprep.subr.mxu0 0.0
    %774 = vmatpush1.msra.mxu0 0.0
    %775 = vmatprep.subr.mxu0 0.0
    %776 = vmatpush1.msra.mxu0 0.0
    %777 = vmatprep.subr.mxu0 0.0
    %778 = vmatpush1.msra.mxu0 0.0
    %779 = vmatprep.subr.mxu0 0.0
    %780 = vmatpush1.msra.mxu0 0.0
    %781 = vmatprep.subr.mxu0 0.0
    %782 = vmatpush1.msra.mxu0 0.0
    %783 = vmatprep.subr.mxu0 0.0
    %784 = vmatpush1.msra.mxu0 0.0
    %785 = vmatprep.subr.mxu0 0.0
    %786 = vmatpush1.msra.mxu0 0.0
    %787 = vmatprep.subr.mxu0 0.0
    %788 = vmatpush1.msra.mxu0 0.0
    %789 = vmatprep.subr.mxu0 0.0
    %790 = vmatpush1.msra.mxu0 0.0
    %791 = vmatprep.subr.mxu0 0.0
    %792 = vmatpush1.msra.mxu0 0.0
    %793 = vmatprep.mubr.f32.mxu0 0.0
    %794 = vmatmul.mubr.f32.gmra.mrb[0].mxu0 %v727
    %v795 = vpop.f32.mrb[0].mxu0
    %v796 = vadd.f32 %v725, %v795
    %v797 = vpop.f32.mrb[0].mxu0
    %v798 = vadd.f32 %v726, %v797
    %799 = vdwg.mxu0
    %v800 = vmul.f32 %v796, 0.5
    %v801 = vtanh.pop %v800
    %v802 = vmul.f32 %v801, 0.5
    %v803 = vadd.f32 %v802, 0.5
    %v804 = vtanh.pop %v798
    %v805 = vmul.f32 %v798, 0.5
    %v806 = vtanh.pop %v805
    %v807 = vmul.f32 %v806, 0.5
    %v808 = vadd.f32 %v807, 0.5
    %v809 = vmul.f32 %v803, %v709
    %v810 = vmul.f32 %v803, %v804
    %812 = vrot.lane.b32.xlu0 %v810, 64
    %v813 = vpop.permute.xlu0 %812
    %v815 = vadd.f32 %v809, %v813
    %v816 = vtanh.pop %v815
    %v817 = vmul.f32 %v808, %v816
    %819 = vrot.lane.b32.xlu0 %v817, 64
    %v820 = vpop.permute.xlu0 %819
    %s822 = scalar_lea.vmem [#allocation3], 8
    %823 = vst.msk [vmem:[%s822] sm:$0xff] %vm370, %v820
    %824 = vrot.lane.b32.xlu0 %v817, 32
    %v825 = vpop.permute.xlu0 %824
    %s827 = scalar_lea.vmem [#allocation4], 48
    %828 = vst.msk [vmem:[%s827] sm:$0xff] %vm370, %v825
    %s829 = smul.u32 2, 2
    %s830 = smul.addr %s829, 8
    %s831 = scalar_lea.vmem [#allocation2], %s830
    %v832 = vld [vmem:[%s831] sm:$0xff]
    %v833 = vld [vmem:[%s831 + $0x8] sm:$0xff]
    %v834 = vsel %vm619, %v820, 0
    %836 = vmatprep.subr.mxu0 %v599
    %837 = vmatpush1.msra.mxu0 %v598
    %838 = vmatprep.subr.mxu0 %v601
    %839 = vmatpush1.msra.mxu0 %v600
    %840 = vmatprep.subr.mxu0 %v603
    %841 = vmatpush1.msra.mxu0 %v602
    %842 = vmatprep.subr.mxu0 %v605
    %843 = vmatpush1.msra.mxu0 %v604
    %844 = vmatprep.subr.mxu0 %v607
    %845 = vmatpush1.msra.mxu0 %v606
    %846 = vmatprep.subr.mxu0 %v609
    %847 = vmatpush1.msra.mxu0 %v608
    %848 = vmatprep.subr.mxu0 %v611
    %849 = vmatpush1.msra.mxu0 %v610
    %850 = vmatprep.subr.mxu0 %v613
    %851 = vmatpush1.msra.mxu0 %v612
    %852 = vmatprep.subr.mxu0 0.0
    %853 = vmatpush1.msra.mxu0 0.0
    %854 = vmatprep.subr.mxu0 0.0
    %855 = vmatpush1.msra.mxu0 0.0
    %856 = vmatprep.subr.mxu0 0.0
    %857 = vmatpush1.msra.mxu0 0.0
    %858 = vmatprep.subr.mxu0 0.0
    %859 = vmatpush1.msra.mxu0 0.0
    %860 = vmatprep.subr.mxu0 0.0
    %861 = vmatpush1.msra.mxu0 0.0
    %862 = vmatprep.subr.mxu0 0.0
    %863 = vmatpush1.msra.mxu0 0.0
    %864 = vmatprep.subr.mxu0 0.0
    %865 = vmatpush1.msra.mxu0 0.0
    %866 = vmatprep.subr.mxu0 0.0
    %867 = vmatpush1.msra.mxu0 0.0
    %868 = vmatprep.subr.mxu0 0.0
    %869 = vmatpush1.msra.mxu0 0.0
    %870 = vmatprep.subr.mxu0 0.0
    %871 = vmatpush1.msra.mxu0 0.0
    %872 = vmatprep.subr.mxu0 0.0
    %873 = vmatpush1.msra.mxu0 0.0
    %874 = vmatprep.subr.mxu0 0.0
    %875 = vmatpush1.msra.mxu0 0.0
    %876 = vmatprep.subr.mxu0 0.0
    %877 = vmatpush1.msra.mxu0 0.0
    %878 = vmatprep.subr.mxu0 0.0
    %879 = vmatpush1.msra.mxu0 0.0
    %880 = vmatprep.subr.mxu0 0.0
    %881 = vmatpush1.msra.mxu0 0.0
    %882 = vmatprep.subr.mxu0 0.0
    %883 = vmatpush1.msra.mxu0 0.0
    %884 = vmatprep.subr.mxu0 0.0
    %885 = vmatpush1.msra.mxu0 0.0
    %886 = vmatprep.subr.mxu0 0.0
    %887 = vmatpush1.msra.mxu0 0.0
    %888 = vmatprep.subr.mxu0 0.0
    %889 = vmatpush1.msra.mxu0 0.0
    %890 = vmatprep.subr.mxu0 0.0
    %891 = vmatpush1.msra.mxu0 0.0
    %892 = vmatprep.subr.mxu0 0.0
    %893 = vmatpush1.msra.mxu0 0.0
    %894 = vmatprep.subr.mxu0 0.0
    %895 = vmatpush1.msra.mxu0 0.0
    %896 = vmatprep.subr.mxu0 0.0
    %897 = vmatpush1.msra.mxu0 0.0
    %898 = vmatprep.subr.mxu0 0.0
    %899 = vmatpush1.msra.mxu0 0.0
    %900 = vmatprep.mubr.f32.mxu0 0.0
    %901 = vmatmul.mubr.f32.gmra.mrb[0].mxu0 %v834
    %v902 = vpop.f32.mrb[0].mxu0
    %v903 = vadd.f32 %v832, %v902
    %v904 = vpop.f32.mrb[0].mxu0
    %v905 = vadd.f32 %v833, %v904
    %906 = vdwg.mxu0
    %v907 = vmul.f32 %v903, 0.5
    %v908 = vtanh.pop %v907
    %v909 = vmul.f32 %v908, 0.5
    %v910 = vadd.f32 %v909, 0.5
    %v911 = vtanh.pop %v905
    %v912 = vmul.f32 %v905, 0.5
    %v913 = vtanh.pop %v912
    %v914 = vmul.f32 %v913, 0.5
    %v915 = vadd.f32 %v914, 0.5
    %v916 = vmul.f32 %v910, %v815
    %v917 = vmul.f32 %v910, %v911
    %919 = vrot.lane.b32.xlu0 %v917, 64
    %v920 = vpop.permute.xlu0 %919
    %v922 = vadd.f32 %v916, %v920
    %v923 = vtanh.pop %v922
    %v924 = vmul.f32 %v915, %v923
    %926 = vrot.lane.b32.xlu0 %v924, 64
    %v927 = vpop.permute.xlu0 %926
    %s929 = scalar_lea.vmem [#allocation3], 16
    %930 = vst.msk [vmem:[%s929] sm:$0xff] %vm370, %v927
    %931 = vrot.lane.b32.xlu0 %v924, 32
    %v932 = vpop.permute.xlu0 %931
    %s934 = scalar_lea.vmem [#allocation4], 40
    %935 = vst.msk [vmem:[%s934] sm:$0xff] %vm370, %v932
    %s936 = smul.u32 3, 2
    %s937 = smul.addr %s936, 8
    %s938 = scalar_lea.vmem [#allocation2], %s937
    %v939 = vld [vmem:[%s938] sm:$0xff]
    %v940 = vld [vmem:[%s938 + $0x8] sm:$0xff]
    %v941 = vsel %vm619, %v927, 0
    %943 = vmatprep.subr.mxu0 %v599
    %944 = vmatpush1.msra.mxu0 %v598
    %945 = vmatprep.subr.mxu0 %v601
    %946 = vmatpush1.msra.mxu0 %v600
    %947 = vmatprep.subr.mxu0 %v603
    %948 = vmatpush1.msra.mxu0 %v602
    %949 = vmatprep.subr.mxu0 %v605
    %950 = vmatpush1.msra.mxu0 %v604
    %951 = vmatprep.subr.mxu0 %v607
    %952 = vmatpush1.msra.mxu0 %v606
    %953 = vmatprep.subr.mxu0 %v609
    %954 = vmatpush1.msra.mxu0 %v608
    %955 = vmatprep.subr.mxu0 %v611
    %956 = vmatpush1.msra.mxu0 %v610
    %957 = vmatprep.subr.mxu0 %v613
    %958 = vmatpush1.msra.mxu0 %v612
    %959 = vmatprep.subr.mxu0 0.0
    %960 = vmatpush1.msra.mxu0 0.0
    %961 = vmatprep.subr.mxu0 0.0
    %962 = vmatpush1.msra.mxu0 0.0
    %963 = vmatprep.subr.mxu0 0.0
    %964 = vmatpush1.msra.mxu0 0.0
    %965 = vmatprep.subr.mxu0 0.0
    %966 = vmatpush1.msra.mxu0 0.0
    %967 = vmatprep.subr.mxu0 0.0
    %968 = vmatpush1.msra.mxu0 0.0
    %969 = vmatprep.subr.mxu0 0.0
    %970 = vmatpush1.msra.mxu0 0.0
    %971 = vmatprep.subr.mxu0 0.0
    %972 = vmatpush1.msra.mxu0 0.0
    %973 = vmatprep.subr.mxu0 0.0
    %974 = vmatpush1.msra.mxu0 0.0
    %975 = vmatprep.subr.mxu0 0.0
    %976 = vmatpush1.msra.mxu0 0.0
    %977 = vmatprep.subr.mxu0 0.0
    %978 = vmatpush1.msra.mxu0 0.0
    %979 = vmatprep.subr.mxu0 0.0
    %980 = vmatpush1.msra.mxu0 0.0
    %981 = vmatprep.subr.mxu0 0.0
    %982 = vmatpush1.msra.mxu0 0.0
    %983 = vmatprep.subr.mxu0 0.0
    %984 = vmatpush1.msra.mxu0 0.0
    %985 = vmatprep.subr.mxu0 0.0
    %986 = vmatpush1.msra.mxu0 0.0
    %987 = vmatprep.subr.mxu0 0.0
    %988 = vmatpush1.msra.mxu0 0.0
    %989 = vmatprep.subr.mxu0 0.0
    %990 = vmatpush1.msra.mxu0 0.0
    %991 = vmatprep.subr.mxu0 0.0
    %992 = vmatpush1.msra.mxu0 0.0
    %993 = vmatprep.subr.mxu0 0.0
    %994 = vmatpush1.msra.mxu0 0.0
    %995 = vmatprep.subr.mxu0 0.0
    %996 = vmatpush1.msra.mxu0 0.0
    %997 = vmatprep.subr.mxu0 0.0
    %998 = vmatpush1.msra.mxu0 0.0
    %999 = vmatprep.subr.mxu0 0.0
    %1000 = vmatpush1.msra.mxu0 0.0
    %1001 = vmatprep.subr.mxu0 0.0
    %1002 = vmatpush1.msra.mxu0 0.0
    %1003 = vmatprep.subr.mxu0 0.0
    %1004 = vmatpush1.msra.mxu0 0.0
    %1005 = vmatprep.subr.mxu0 0.0
    %1006 = vmatpush1.msra.mxu0 0.0
    %1007 = vmatprep.mubr.f32.mxu0 0.0
    %1008 = vmatmul.mubr.f32.gmra.mrb[0].mxu0 %v941
    %v1009 = vpop.f32.mrb[0].mxu0
    %v1010 = vadd.f32 %v939, %v1009
    %v1011 = vpop.f32.mrb[0].mxu0
    %v1012 = vadd.f32 %v940, %v1011
    %1013 = vdwg.mxu0
    %v1014 = vmul.f32 %v1010, 0.5
    %v1015 = vtanh.pop %v1014
    %v1016 = vmul.f32 %v1015, 0.5
    %v1017 = vadd.f32 %v1016, 0.5
    %v1018 = vtanh.pop %v1012
    %v1019 = vmul.f32 %v1012, 0.5
    %v1020 = vtanh.pop %v1019
    %v1021 = vmul.f32 %v1020, 0.5
    %v1022 = vadd.f32 %v1021, 0.5
    %v1023 = vmul.f32 %v1017, %v922
    %v1024 = vmul.f32 %v1017, %v1018
    %1026 = vrot.lane.b32.xlu0 %v1024, 64
    %v1027 = vpop.permute.xlu0 %1026
    %v1029 = vadd.f32 %v1023, %v1027
    %v1030 = vtanh.pop %v1029
    %v1031 = vmul.f32 %v1022, %v1030
    %1033 = vrot.lane.b32.xlu0 %v1031, 64
    %v1034 = vpop.permute.xlu0 %1033
    %s1036 = scalar_lea.vmem [#allocation3], 24
    %1037 = vst.msk [vmem:[%s1036] sm:$0xff] %vm370, %v1034
    %1038 = vrot.lane.b32.xlu0 %v1031, 32
    %v1039 = vpop.permute.xlu0 %1038
    %s1041 = scalar_lea.vmem [#allocation4], 32
    %1042 = vst.msk [vmem:[%s1041] sm:$0xff] %vm370, %v1039
    %s1043 = smul.u32 4, 2
    %s1044 = smul.addr %s1043, 8
    %s1045 = scalar_lea.vmem [#allocation2], %s1044
    %v1046 = vld [vmem:[%s1045] sm:$0xff]
    %v1047 = vld [vmem:[%s1045 + $0x8] sm:$0xff]
    %v1048 = vsel %vm619, %v1034, 0
    %1050 = vmatprep.subr.mxu0 %v599
    %1051 = vmatpush1.msra.mxu0 %v598
    %1052 = vmatprep.subr.mxu0 %v601
    %1053 = vmatpush1.msra.mxu0 %v600
    %1054 = vmatprep.subr.mxu0 %v603
    %1055 = vmatpush1.msra.mxu0 %v602
    %1056 = vmatprep.subr.mxu0 %v605
    %1057 = vmatpush1.msra.mxu0 %v604
    %1058 = vmatprep.subr.mxu0 %v607
    %1059 = vmatpush1.msra.mxu0 %v606
    %1060 = vmatprep.subr.mxu0 %v609
    %1061 = vmatpush1.msra.mxu0 %v608
    %1062 = vmatprep.subr.mxu0 %v611
    %1063 = vmatpush1.msra.mxu0 %v610
    %1064 = vmatprep.subr.mxu0 %v613
    %1065 = vmatpush1.msra.mxu0 %v612
    %1066 = vmatprep.subr.mxu0 0.0
    %1067 = vmatpush1.msra.mxu0 0.0
    %1068 = vmatprep.subr.mxu0 0.0
    %1069 = vmatpush1.msra.mxu0 0.0
    %1070 = vmatprep.subr.mxu0 0.0
    %1071 = vmatpush1.msra.mxu0 0.0
    %1072 = vmatprep.subr.mxu0 0.0
    %1073 = vmatpush1.msra.mxu0 0.0
    %1074 = vmatprep.subr.mxu0 0.0
    %1075 = vmatpush1.msra.mxu0 0.0
    %1076 = vmatprep.subr.mxu0 0.0
    %1077 = vmatpush1.msra.mxu0 0.0
    %1078 = vmatprep.subr.mxu0 0.0
    %1079 = vmatpush1.msra.mxu0 0.0
    %1080 = vmatprep.subr.mxu0 0.0
    %1081 = vmatpush1.msra.mxu0 0.0
    %1082 = vmatprep.subr.mxu0 0.0
    %1083 = vmatpush1.msra.mxu0 0.0
    %1084 = vmatprep.subr.mxu0 0.0
    %1085 = vmatpush1.msra.mxu0 0.0
    %1086 = vmatprep.subr.mxu0 0.0
    %1087 = vmatpush1.msra.mxu0 0.0
    %1088 = vmatprep.subr.mxu0 0.0
    %1089 = vmatpush1.msra.mxu0 0.0
    %1090 = vmatprep.subr.mxu0 0.0
    %1091 = vmatpush1.msra.mxu0 0.0
    %1092 = vmatprep.subr.mxu0 0.0
    %1093 = vmatpush1.msra.mxu0 0.0
    %1094 = vmatprep.subr.mxu0 0.0
    %1095 = vmatpush1.msra.mxu0 0.0
    %1096 = vmatprep.subr.mxu0 0.0
    %1097 = vmatpush1.msra.mxu0 0.0
    %1098 = vmatprep.subr.mxu0 0.0
    %1099 = vmatpush1.msra.mxu0 0.0
    %1100 = vmatprep.subr.mxu0 0.0
    %1101 = vmatpush1.msra.mxu0 0.0
    %1102 = vmatprep.subr.mxu0 0.0
    %1103 = vmatpush1.msra.mxu0 0.0
    %1104 = vmatprep.subr.mxu0 0.0
    %1105 = vmatpush1.msra.mxu0 0.0
    %1106 = vmatprep.subr.mxu0 0.0
    %1107 = vmatpush1.msra.mxu0 0.0
    %1108 = vmatprep.subr.mxu0 0.0
    %1109 = vmatpush1.msra.mxu0 0.0
    %1110 = vmatprep.subr.mxu0 0.0
    %1111 = vmatpush1.msra.mxu0 0.0
    %1112 = vmatprep.subr.mxu0 0.0
    %1113 = vmatpush1.msra.mxu0 0.0
    %1114 = vmatprep.mubr.f32.mxu0 0.0
    %1115 = vmatmul.mubr.f32.gmra.mrb[0].mxu0 %v1048
    %v1116 = vpop.f32.mrb[0].mxu0
    %v1117 = vadd.f32 %v1046, %v1116
    %v1118 = vpop.f32.mrb[0].mxu0
    %v1119 = vadd.f32 %v1047, %v1118
    %1120 = vdwg.mxu0
    %v1121 = vmul.f32 %v1117, 0.5
    %v1122 = vtanh.pop %v1121
    %v1123 = vmul.f32 %v1122, 0.5
    %v1124 = vadd.f32 %v1123, 0.5
    %v1125 = vtanh.pop %v1119
    %v1126 = vmul.f32 %v1119, 0.5
    %v1127 = vtanh.pop %v1126
    %v1128 = vmul.f32 %v1127, 0.5
    %v1129 = vadd.f32 %v1128, 0.5
    %v1130 = vmul.f32 %v1124, %v1029
    %v1131 = vmul.f32 %v1124, %v1125
    %1133 = vrot.lane.b32.xlu0 %v1131, 64
    %v1134 = vpop.permute.xlu0 %1133
    %v1136 = vadd.f32 %v1130, %v1134
    %v1137 = vtanh.pop %v1136
    %v1138 = vmul.f32 %v1129, %v1137
    %1140 = vrot.lane.b32.xlu0 %v1138, 64
    %v1141 = vpop.permute.xlu0 %1140
    %s1143 = scalar_lea.vmem [#allocation3], 32
    %1144 = vst.msk [vmem:[%s1143] sm:$0xff] %vm370, %v1141
    %1145 = vrot.lane.b32.xlu0 %v1138, 32
    %v1146 = vpop.permute.xlu0 %1145
    %s1148 = scalar_lea.vmem [#allocation4], 24
    %1149 = vst.msk [vmem:[%s1148] sm:$0xff] %vm370, %v1146
    %s1150 = smul.u32 5, 2
    %s1151 = smul.addr %s1150, 8
    %s1152 = scalar_lea.vmem [#allocation2], %s1151
    %v1153 = vld [vmem:[%s1152] sm:$0xff]
    %v1154 = vld [vmem:[%s1152 + $0x8] sm:$0xff]
    %v1155 = vsel %vm619, %v1141, 0
    %1157 = vmatprep.subr.mxu0 %v599
    %1158 = vmatpush1.msra.mxu0 %v598
    %1159 = vmatprep.subr.mxu0 %v601
    %1160 = vmatpush1.msra.mxu0 %v600
    %1161 = vmatprep.subr.mxu0 %v603
    %1162 = vmatpush1.msra.mxu0 %v602
    %1163 = vmatprep.subr.mxu0 %v605
    %1164 = vmatpush1.msra.mxu0 %v604
    %1165 = vmatprep.subr.mxu0 %v607
    %1166 = vmatpush1.msra.mxu0 %v606
    %1167 = vmatprep.subr.mxu0 %v609
    %1168 = vmatpush1.msra.mxu0 %v608
    %1169 = vmatprep.subr.mxu0 %v611
    %1170 = vmatpush1.msra.mxu0 %v610
    %1171 = vmatprep.subr.mxu0 %v613
    %1172 = vmatpush1.msra.mxu0 %v612
    %1173 = vmatprep.subr.mxu0 0.0
    %1174 = vmatpush1.msra.mxu0 0.0
    %1175 = vmatprep.subr.mxu0 0.0
    %1176 = vmatpush1.msra.mxu0 0.0
    %1177 = vmatprep.subr.mxu0 0.0
    %1178 = vmatpush1.msra.mxu0 0.0
    %1179 = vmatprep.subr.mxu0 0.0
    %1180 = vmatpush1.msra.mxu0 0.0
    %1181 = vmatprep.subr.mxu0 0.0
    %1182 = vmatpush1.msra.mxu0 0.0
    %1183 = vmatprep.subr.mxu0 0.0
    %1184 = vmatpush1.msra.mxu0 0.0
    %1185 = vmatprep.subr.mxu0 0.0
    %1186 = vmatpush1.msra.mxu0 0.0
    %1187 = vmatprep.subr.mxu0 0.0
    %1188 = vmatpush1.msra.mxu0 0.0
    %1189 = vmatprep.subr.mxu0 0.0
    %1190 = vmatpush1.msra.mxu0 0.0
    %1191 = vmatprep.subr.mxu0 0.0
    %1192 = vmatpush1.msra.mxu0 0.0
    %1193 = vmatprep.subr.mxu0 0.0
    %1194 = vmatpush1.msra.mxu0 0.0
    %1195 = vmatprep.subr.mxu0 0.0
    %1196 = vmatpush1.msra.mxu0 0.0
    %1197 = vmatprep.subr.mxu0 0.0
    %1198 = vmatpush1.msra.mxu0 0.0
    %1199 = vmatprep.subr.mxu0 0.0
    %1200 = vmatpush1.msra.mxu0 0.0
    %1201 = vmatprep.subr.mxu0 0.0
    %1202 = vmatpush1.msra.mxu0 0.0
    %1203 = vmatprep.subr.mxu0 0.0
    %1204 = vmatpush1.msra.mxu0 0.0
    %1205 = vmatprep.subr.mxu0 0.0
    %1206 = vmatpush1.msra.mxu0 0.0
    %1207 = vmatprep.subr.mxu0 0.0
    %1208 = vmatpush1.msra.mxu0 0.0
    %1209 = vmatprep.subr.mxu0 0.0
    %1210 = vmatpush1.msra.mxu0 0.0
    %1211 = vmatprep.subr.mxu0 0.0
    %1212 = vmatpush1.msra.mxu0 0.0
    %1213 = vmatprep.subr.mxu0 0.0
    %1214 = vmatpush1.msra.mxu0 0.0
    %1215 = vmatprep.subr.mxu0 0.0
    %1216 = vmatpush1.msra.mxu0 0.0
    %1217 = vmatprep.subr.mxu0 0.0
    %1218 = vmatpush1.msra.mxu0 0.0
    %1219 = vmatprep.subr.mxu0 0.0
    %1220 = vmatpush1.msra.mxu0 0.0
    %1221 = vmatprep.mubr.f32.mxu0 0.0
    %1222 = vmatmul.mubr.f32.gmra.mrb[0].mxu0 %v1155
    %v1223 = vpop.f32.mrb[0].mxu0
    %v1224 = vadd.f32 %v1153, %v1223
    %v1225 = vpop.f32.mrb[0].mxu0
    %v1226 = vadd.f32 %v1154, %v1225
    %1227 = vdwg.mxu0
    %v1228 = vmul.f32 %v1224, 0.5
    %v1229 = vtanh.pop %v1228
    %v1230 = vmul.f32 %v1229, 0.5
    %v1231 = vadd.f32 %v1230, 0.5
    %v1232 = vtanh.pop %v1226
    %v1233 = vmul.f32 %v1226, 0.5
    %v1234 = vtanh.pop %v1233
    %v1235 = vmul.f32 %v1234, 0.5
    %v1236 = vadd.f32 %v1235, 0.5
    %v1237 = vmul.f32 %v1231, %v1136
    %v1238 = vmul.f32 %v1231, %v1232
    %1240 = vrot.lane.b32.xlu0 %v1238, 64
    %v1241 = vpop.permute.xlu0 %1240
    %v1243 = vadd.f32 %v1237, %v1241
    %v1244 = vtanh.pop %v1243
    %v1245 = vmul.f32 %v1236, %v1244
    %1247 = vrot.lane.b32.xlu0 %v1245, 64
    %v1248 = vpop.permute.xlu0 %1247
    %s1250 = scalar_lea.vmem [#allocation3], 40
    %1251 = vst.msk [vmem:[%s1250] sm:$0xff] %vm370, %v1248
    %1252 = vrot.lane.b32.xlu0 %v1245, 32
    %v1253 = vpop.permute.xlu0 %1252
    %s1255 = scalar_lea.vmem [#allocation4], 16
    %1256 = vst.msk [vmem:[%s1255] sm:$0xff] %vm370, %v1253
    %s1257 = smul.u32 6, 2
    %s1258 = smul.addr %s1257, 8
    %s1259 = scalar_lea.vmem [#allocation2], %s1258
    %v1260 = vld [vmem:[%s1259] sm:$0xff]
    %v1261 = vld [vmem:[%s1259 + $0x8] sm:$0xff]
    %v1262 = vsel %vm619, %v1248, 0
    %1264 = vmatprep.subr.mxu0 %v599
    %1265 = vmatpush1.msra.mxu0 %v598
    %1266 = vmatprep.subr.mxu0 %v601
    %1267 = vmatpush1.msra.mxu0 %v600
    %1268 = vmatprep.subr.mxu0 %v603
    %1269 = vmatpush1.msra.mxu0 %v602
    %1270 = vmatprep.subr.mxu0 %v605
    %1271 = vmatpush1.msra.mxu0 %v604
    %1272 = vmatprep.subr.mxu0 %v607
    %1273 = vmatpush1.msra.mxu0 %v606
    %1274 = vmatprep.subr.mxu0 %v609
    %1275 = vmatpush1.msra.mxu0 %v608
    %1276 = vmatprep.subr.mxu0 %v611
    %1277 = vmatpush1.msra.mxu0 %v610
    %1278 = vmatprep.subr.mxu0 %v613
    %1279 = vmatpush1.msra.mxu0 %v612
    %1280 = vmatprep.subr.mxu0 0.0
    %1281 = vmatpush1.msra.mxu0 0.0
    %1282 = vmatprep.subr.mxu0 0.0
    %1283 = vmatpush1.msra.mxu0 0.0
    %1284 = vmatprep.subr.mxu0 0.0
    %1285 = vmatpush1.msra.mxu0 0.0
    %1286 = vmatprep.subr.mxu0 0.0
    %1287 = vmatpush1.msra.mxu0 0.0
    %1288 = vmatprep.subr.mxu0 0.0
    %1289 = vmatpush1.msra.mxu0 0.0
    %1290 = vmatprep.subr.mxu0 0.0
    %1291 = vmatpush1.msra.mxu0 0.0
    %1292 = vmatprep.subr.mxu0 0.0
    %1293 = vmatpush1.msra.mxu0 0.0
    %1294 = vmatprep.subr.mxu0 0.0
    %1295 = vmatpush1.msra.mxu0 0.0
    %1296 = vmatprep.subr.mxu0 0.0
    %1297 = vmatpush1.msra.mxu0 0.0
    %1298 = vmatprep.subr.mxu0 0.0
    %1299 = vmatpush1.msra.mxu0 0.0
    %1300 = vmatprep.subr.mxu0 0.0
    %1301 = vmatpush1.msra.mxu0 0.0
    %1302 = vmatprep.subr.mxu0 0.0
    %1303 = vmatpush1.msra.mxu0 0.0
    %1304 = vmatprep.subr.mxu0 0.0
    %1305 = vmatpush1.msra.mxu0 0.0
    %1306 = vmatprep.subr.mxu0 0.0
    %1307 = vmatpush1.msra.mxu0 0.0
    %1308 = vmatprep.subr.mxu0 0.0
    %1309 = vmatpush1.msra.mxu0 0.0
    %1310 = vmatprep.subr.mxu0 0.0
    %1311 = vmatpush1.msra.mxu0 0.0
    %1312 = vmatprep.subr.mxu0 0.0
    %1313 = vmatpush1.msra.mxu0 0.0
    %1314 = vmatprep.subr.mxu0 0.0
    %1315 = vmatpush1.msra.mxu0 0.0
    %1316 = vmatprep.subr.mxu0 0.0
    %1317 = vmatpush1.msra.mxu0 0.0
    %1318 = vmatprep.subr.mxu0 0.0
    %1319 = vmatpush1.msra.mxu0 0.0
    %1320 = vmatprep.subr.mxu0 0.0
    %1321 = vmatpush1.msra.mxu0 0.0
    %1322 = vmatprep.subr.mxu0 0.0
    %1323 = vmatpush1.msra.mxu0 0.0
    %1324 = vmatprep.subr.mxu0 0.0
    %1325 = vmatpush1.msra.mxu0 0.0
    %1326 = vmatprep.subr.mxu0 0.0
    %1327 = vmatpush1.msra.mxu0 0.0
    %1328 = vmatprep.mubr.f32.mxu0 0.0
    %1329 = vmatmul.mubr.f32.gmra.mrb[0].mxu0 %v1262
    %v1330 = vpop.f32.mrb[0].mxu0
    %v1331 = vadd.f32 %v1260, %v1330
    %v1332 = vpop.f32.mrb[0].mxu0
    %v1333 = vadd.f32 %v1261, %v1332
    %1334 = vdwg.mxu0
    %v1335 = vmul.f32 %v1331, 0.5
    %v1336 = vtanh.pop %v1335
    %v1337 = vmul.f32 %v1336, 0.5
    %v1338 = vadd.f32 %v1337, 0.5
    %v1339 = vtanh.pop %v1333
    %v1340 = vmul.f32 %v1333, 0.5
    %v1341 = vtanh.pop %v1340
    %v1342 = vmul.f32 %v1341, 0.5
    %v1343 = vadd.f32 %v1342, 0.5
    %v1344 = vmul.f32 %v1338, %v1243
    %v1345 = vmul.f32 %v1338, %v1339
    %1347 = vrot.lane.b32.xlu0 %v1345, 64
    %v1348 = vpop.permute.xlu0 %1347
    %v1350 = vadd.f32 %v1344, %v1348
    %v1351 = vtanh.pop %v1350
    %v1352 = vmul.f32 %v1343, %v1351
    %1354 = vrot.lane.b32.xlu0 %v1352, 64
    %v1355 = vpop.permute.xlu0 %1354
    %s1357 = scalar_lea.vmem [#allocation3], 48
    %1358 = vst.msk [vmem:[%s1357] sm:$0xff] %vm370, %v1355
    %1359 = vrot.lane.b32.xlu0 %v1352, 32
    %v1360 = vpop.permute.xlu0 %1359
    %s1362 = scalar_lea.vmem [#allocation4], 8
    %1363 = vst.msk [vmem:[%s1362] sm:$0xff] %vm370, %v1360
    %s1364 = smul.u32 7, 2
    %s1365 = smul.addr %s1364, 8
    %s1366 = scalar_lea.vmem [#allocation2], %s1365
    %v1367 = vld [vmem:[%s1366] sm:$0xff]
    %v1368 = vld [vmem:[%s1366 + $0x8] sm:$0xff]
    %v1369 = vsel %vm619, %v1355, 0
    %1371 = vmatprep.subr.mxu0 %v599
    %1372 = vmatpush1.msra.mxu0 %v598
    %1373 = vmatprep.subr.mxu0 %v601
    %1374 = vmatpush1.msra.mxu0 %v600
    %1375 = vmatprep.subr.mxu0 %v603
    %1376 = vmatpush1.msra.mxu0 %v602
    %1377 = vmatprep.subr.mxu0 %v605
    %1378 = vmatpush1.msra.mxu0 %v604
    %1379 = vmatprep.subr.mxu0 %v607
    %1380 = vmatpush1.msra.mxu0 %v606
    %1381 = vmatprep.subr.mxu0 %v609
    %1382 = vmatpush1.msra.mxu0 %v608
    %1383 = vmatprep.subr.mxu0 %v611
    %1384 = vmatpush1.msra.mxu0 %v610
    %1385 = vmatprep.subr.mxu0 %v613
    %1386 = vmatpush1.msra.mxu0 %v612
    %1387 = vmatprep.subr.mxu0 0.0
    %1388 = vmatpush1.msra.mxu0 0.0
    %1389 = vmatprep.subr.mxu0 0.0
    %1390 = vmatpush1.msra.mxu0 0.0
    %1391 = vmatprep.subr.mxu0 0.0
    %1392 = vmatpush1.msra.mxu0 0.0
    %1393 = vmatprep.subr.mxu0 0.0
    %1394 = vmatpush1.msra.mxu0 0.0
    %1395 = vmatprep.subr.mxu0 0.0
    %1396 = vmatpush1.msra.mxu0 0.0
    %1397 = vmatprep.subr.mxu0 0.0
    %1398 = vmatpush1.msra.mxu0 0.0
    %1399 = vmatprep.subr.mxu0 0.0
    %1400 = vmatpush1.msra.mxu0 0.0
    %1401 = vmatprep.subr.mxu0 0.0
    %1402 = vmatpush1.msra.mxu0 0.0
    %1403 = vmatprep.subr.mxu0 0.0
    %1404 = vmatpush1.msra.mxu0 0.0
    %1405 = vmatprep.subr.mxu0 0.0
    %1406 = vmatpush1.msra.mxu0 0.0
    %1407 = vmatprep.subr.mxu0 0.0
    %1408 = vmatpush1.msra.mxu0 0.0
    %1409 = vmatprep.subr.mxu0 0.0
    %1410 = vmatpush1.msra.mxu0 0.0
    %1411 = vmatprep.subr.mxu0 0.0
    %1412 = vmatpush1.msra.mxu0 0.0
    %1413 = vmatprep.subr.mxu0 0.0
    %1414 = vmatpush1.msra.mxu0 0.0
    %1415 = vmatprep.subr.mxu0 0.0
    %1416 = vmatpush1.msra.mxu0 0.0
    %1417 = vmatprep.subr.mxu0 0.0
    %1418 = vmatpush1.msra.mxu0 0.0
    %1419 = vmatprep.subr.mxu0 0.0
    %1420 = vmatpush1.msra.mxu0 0.0
    %1421 = vmatprep.subr.mxu0 0.0
    %1422 = vmatpush1.msra.mxu0 0.0
    %1423 = vmatprep.subr.mxu0 0.0
    %1424 = vmatpush1.msra.mxu0 0.0
    %1425 = vmatprep.subr.mxu0 0.0
    %1426 = vmatpush1.msra.mxu0 0.0
    %1427 = vmatprep.subr.mxu0 0.0
    %1428 = vmatpush1.msra.mxu0 0.0
    %1429 = vmatprep.subr.mxu0 0.0
    %1430 = vmatpush1.msra.mxu0 0.0
    %1431 = vmatprep.subr.mxu0 0.0
    %1432 = vmatpush1.msra.mxu0 0.0
    %1433 = vmatprep.subr.mxu0 0.0
    %1434 = vmatpush1.msra.mxu0 0.0
    %1435 = vmatprep.mubr.f32.mxu0 0.0
    %1436 = vmatmul.mubr.f32.gmra.mrb[0].mxu0 %v1369
    %v1437 = vpop.f32.mrb[0].mxu0
    %v1438 = vadd.f32 %v1367, %v1437
    %v1439 = vpop.f32.mrb[0].mxu0
    %v1440 = vadd.f32 %v1368, %v1439
    %1441 = vdwg.mxu0
    %v1442 = vmul.f32 %v1438, 0.5
    %v1443 = vtanh.pop %v1442
    %v1444 = vmul.f32 %v1443, 0.5
    %v1445 = vadd.f32 %v1444, 0.5
    %v1446 = vtanh.pop %v1440
    %v1447 = vmul.f32 %v1440, 0.5
    %v1448 = vtanh.pop %v1447
    %v1449 = vmul.f32 %v1448, 0.5
    %v1450 = vadd.f32 %v1449, 0.5
    %v1451 = vmul.f32 %v1445, %v1350
    %v1452 = vmul.f32 %v1445, %v1446
    %1454 = vrot.lane.b32.xlu0 %v1452, 64
    %v1455 = vpop.permute.xlu0 %1454
    %v1457 = vadd.f32 %v1451, %v1455
    %v1458 = vtanh.pop %v1457
    %v1459 = vmul.f32 %v1450, %v1458
    %1461 = vrot.lane.b32.xlu0 %v1459, 64
    %v1462 = vpop.permute.xlu0 %1461
    %s1464 = scalar_lea.vmem [#allocation3], 56
    %1465 = vst.msk [vmem:[%s1464] sm:$0xff] %vm370, %v1462
    %1466 = vrot.lane.b32.xlu0 %v1459, 32
    %v1467 = vpop.permute.xlu0 %1466
    %1469 = vst.msk [vmem:[#allocation4] sm:$0xff] %vm370, %v1467
    %v1470 = vld [vmem:[#allocation3] sm:$0xff]
    %v1471 = vld [vmem:[#allocation3 + $0x8] sm:$0xff]
    %v1472 = vld [vmem:[#allocation3 + $0x10] sm:$0xff]
    %v1473 = vld [vmem:[#allocation3 + $0x18] sm:$0xff]
    %v1474 = vld [vmem:[#allocation3 + $0x20] sm:$0xff]
    %v1475 = vld [vmem:[#allocation3 + $0x28] sm:$0xff]
    %v1476 = vld [vmem:[#allocation3 + $0x30] sm:$0xff]
    %v1477 = vld [vmem:[#allocation3 + $0x38] sm:$0xff]
    %v1478 = vld [vmem:[%s7] sm:$0xff]
    %v1479 = vld [vmem:[%s7 + $0x8] sm:$0xff]
    %v1480 = vld [vmem:[%s7 + $0x10] sm:$0xff]
    %v1481 = vld [vmem:[%s7 + $0x18] sm:$0xff]
    %v1482 = vld [vmem:[#allocation4] sm:$0xff]
    %v1483 = vld [vmem:[#allocation4 + $0x8] sm:$0xff]
    %v1484 = vld [vmem:[#allocation4 + $0x10] sm:$0xff]
    %v1485 = vld [vmem:[#allocation4 + $0x18] sm:$0xff]
    %v1486 = vld [vmem:[#allocation4 + $0x20] sm:$0xff]
    %v1487 = vld [vmem:[#allocation4 + $0x28] sm:$0xff]
    %v1488 = vld [vmem:[#allocation4 + $0x30] sm:$0xff]
    %v1489 = vld [vmem:[#allocation4 + $0x38] sm:$0xff]
    %v1490 = vld [vmem:[#allocation10] sm:$0xff]
    %v1491 = vld [vmem:[#allocation10 + $0x8] sm:$0xff]
    %v1492 = vld [vmem:[#allocation10 + $0x10] sm:$0xff]
    %v1493 = vld [vmem:[#allocation10 + $0x18] sm:$0xff]
    %v1495 = vsel %vm370, %v1482, 0
    %v1498 = vsel %vm370, %v1483, 0
    %v1501 = vsel %vm370, %v1484, 0
    %v1504 = vsel %vm370, %v1485, 0
    %v1507 = vsel %vm370, %v1486, 0
    %v1510 = vsel %vm370, %v1487, 0
    %v1513 = vsel %vm370, %v1488, 0
    %v1516 = vsel %vm370, %v1489, 0
    %1518 = vmatprep.subr.mxu0 0.0
    %1519 = vmatpush1.msra.mxu0 %v1490
    %1520 = vmatprep.subr.mxu0 0.0
    %1521 = vmatpush1.msra.mxu0 %v1491
    %1522 = vmatprep.subr.mxu0 0.0
    %1523 = vmatpush1.msra.mxu0 %v1492
    %1524 = vmatprep.subr.mxu0 0.0
    %1525 = vmatpush1.msra.mxu0 %v1493
    %1526 = vmatprep.subr.mxu0 0.0
    %1527 = vmatpush1.msra.mxu0 0.0
    %1528 = vmatprep.subr.mxu0 0.0
    %1529 = vmatpush1.msra.mxu0 0.0
    %1530 = vmatprep.subr.mxu0 0.0
    %1531 = vmatpush1.msra.mxu0 0.0
    %1532 = vmatprep.subr.mxu0 0.0
    %1533 = vmatpush1.msra.mxu0 0.0
    %1534 = vmatprep.subr.mxu0 0.0
    %1535 = vmatpush1.msra.mxu0 0.0
    %1536 = vmatprep.subr.mxu0 0.0
    %1537 = vmatpush1.msra.mxu0 0.0
    %1538 = vmatprep.subr.mxu0 0.0
    %1539 = vmatpush1.msra.mxu0 0.0
    %1540 = vmatprep.subr.mxu0 0.0
    %1541 = vmatpush1.msra.mxu0 0.0
    %1542 = vmatprep.subr.mxu0 0.0
    %1543 = vmatpush1.msra.mxu0 0.0
    %1544 = vmatprep.subr.mxu0 0.0
    %1545 = vmatpush1.msra.mxu0 0.0
    %1546 = vmatprep.subr.mxu0 0.0
    %1547 = vmatpush1.msra.mxu0 0.0
    %1548 = vmatprep.subr.mxu0 0.0
    %1549 = vmatpush1.msra.mxu0 0.0
    %1550 = vmatprep.subr.mxu0 0.0
    %1551 = vmatpush1.msra.mxu0 0.0
    %1552 = vmatprep.subr.mxu0 0.0
    %1553 = vmatpush1.msra.mxu0 0.0
    %1554 = vmatprep.subr.mxu0 0.0
    %1555 = vmatpush1.msra.mxu0 0.0
    %1556 = vmatprep.subr.mxu0 0.0
    %1557 = vmatpush1.msra.mxu0 0.0
    %1558 = vmatprep.subr.mxu0 0.0
    %1559 = vmatpush1.msra.mxu0 0.0
    %1560 = vmatprep.subr.mxu0 0.0
    %1561 = vmatpush1.msra.mxu0 0.0
    %1562 = vmatprep.subr.mxu0 0.0
    %1563 = vmatpush1.msra.mxu0 0.0
    %1564 = vmatprep.subr.mxu0 0.0
    %1565 = vmatpush1.msra.mxu0 0.0
    %1566 = vmatprep.subr.mxu0 0.0
    %1567 = vmatpush1.msra.mxu0 0.0
    %1568 = vmatprep.subr.mxu0 0.0
    %1569 = vmatpush1.msra.mxu0 0.0
    %1570 = vmatprep.subr.mxu0 0.0
    %1571 = vmatpush1.msra.mxu0 0.0
    %1572 = vmatprep.subr.mxu0 0.0
    %1573 = vmatpush1.msra.mxu0 0.0
    %1574 = vmatprep.subr.mxu0 0.0
    %1575 = vmatpush1.msra.mxu0 0.0
    %1576 = vmatprep.subr.mxu0 0.0
    %1577 = vmatpush1.msra.mxu0 0.0
    %1578 = vmatprep.subr.mxu0 0.0
    %1579 = vmatpush1.msra.mxu0 0.0
    %1580 = vmatprep.subr.mxu0 0.0
    %1581 = vmatpush1.msra.mxu0 0.0
    %1582 = vmatprep.mubr.f32.mxu0 0.0
    %1583 = vmatmul.mubr.f32.gmra.mrb[0].mxu0 %v1495
    %v1584 = vpop.f32.mrb[0].mxu0
    %v1585 = vadd.f32 0.0, %v1584
    %v1586 = vpop.f32.mrb[0].mxu0
    %1587 = vmatprep.mubr.f32.mxu0 0.0
    %1588 = vmatmul.mubr.f32.gmra.mrb[0].mxu0 %v1498
    %v1589 = vpop.f32.mrb[0].mxu0
    %v1590 = vadd.f32 0.0, %v1589
    %v1591 = vpop.f32.mrb[0].mxu0
    %1592 = vmatprep.mubr.f32.mxu0 0.0
    %1593 = vmatmul.mubr.f32.gmra.mrb[0].mxu0 %v1501
    %v1594 = vpop.f32.mrb[0].mxu0
    %v1595 = vadd.f32 0.0, %v1594
    %v1596 = vpop.f32.mrb[0].mxu0
    %1597 = vmatprep.mubr.f32.mxu0 0.0
    %1598 = vmatmul.mubr.f32.gmra.mrb[0].mxu0 %v1504
    %v1599 = vpop.f32.mrb[0].mxu0
    %v1600 = vadd.f32 0.0, %v1599
    %v1601 = vpop.f32.mrb[0].mxu0
    %1602 = vmatprep.mubr.f32.mxu0 0.0
    %1603 = vmatmul.mubr.f32.gmra.mrb[0].mxu0 %v1507
    %v1604 = vpop.f32.mrb[0].mxu0
    %v1605 = vadd.f32 0.0, %v1604
    %v1606 = vpop.f32.mrb[0].mxu0
    %1607 = vmatprep.mubr.f32.mxu0 0.0
    %1608 = vmatmul.mubr.f32.gmra.mrb[0].mxu0 %v1510
    %v1609 = vpop.f32.mrb[0].mxu0
    %v1610 = vadd.f32 0.0, %v1609
    %v1611 = vpop.f32.mrb[0].mxu0
    %1612 = vmatprep.mubr.f32.mxu0 0.0
    %1613 = vmatmul.mubr.f32.gmra.mrb[0].mxu0 %v1513
    %v1614 = vpop.f32.mrb[0].mxu0
    %v1615 = vadd.f32 0.0, %v1614
    %v1616 = vpop.f32.mrb[0].mxu0
    %1617 = vmatprep.mubr.f32.mxu0 0.0
    %1618 = vmatmul.mubr.f32.gmra.mrb[0].mxu0 %v1516
    %v1619 = vpop.f32.mrb[0].mxu0
    %v1620 = vadd.f32 0.0, %v1619
    %v1621 = vpop.f32.mrb[0].mxu0
    %1622 = vdwg.mxu0
    %v1624 = vsel %vm370, %v1470, 0
    %v1627 = vsel %vm370, %v1471, 0
    %v1630 = vsel %vm370, %v1472, 0
    %v1633 = vsel %vm370, %v1473, 0
    %v1636 = vsel %vm370, %v1474, 0
    %v1639 = vsel %vm370, %v1475, 0
    %v1642 = vsel %vm370, %v1476, 0
    %v1645 = vsel %vm370, %v1477, 0
    %1647 = vmatprep.subr.mxu0 0.0
    %1648 = vmatpush1.msra.mxu0 %v1478
    %1649 = vmatprep.subr.mxu0 0.0
    %1650 = vmatpush1.msra.mxu0 %v1479
    %1651 = vmatprep.subr.mxu0 0.0
    %1652 = vmatpush1.msra.mxu0 %v1480
    %1653 = vmatprep.subr.mxu0 0.0
    %1654 = vmatpush1.msra.mxu0 %v1481
    %1655 = vmatprep.subr.mxu0 0.0
    %1656 = vmatpush1.msra.mxu0 0.0
    %1657 = vmatprep.subr.mxu0 0.0
    %1658 = vmatpush1.msra.mxu0 0.0
    %1659 = vmatprep.subr.mxu0 0.0
    %1660 = vmatpush1.msra.mxu0 0.0
    %1661 = vmatprep.subr.mxu0 0.0
    %1662 = vmatpush1.msra.mxu0 0.0
    %1663 = vmatprep.subr.mxu0 0.0
    %1664 = vmatpush1.msra.mxu0 0.0
    %1665 = vmatprep.subr.mxu0 0.0
    %1666 = vmatpush1.msra.mxu0 0.0
    %1667 = vmatprep.subr.mxu0 0.0
    %1668 = vmatpush1.msra.mxu0 0.0
    %1669 = vmatprep.subr.mxu0 0.0
    %1670 = vmatpush1.msra.mxu0 0.0
    %1671 = vmatprep.subr.mxu0 0.0
    %1672 = vmatpush1.msra.mxu0 0.0
    %1673 = vmatprep.subr.mxu0 0.0
    %1674 = vmatpush1.msra.mxu0 0.0
    %1675 = vmatprep.subr.mxu0 0.0
    %1676 = vmatpush1.msra.mxu0 0.0
    %1677 = vmatprep.subr.mxu0 0.0
    %1678 = vmatpush1.msra.mxu0 0.0
    %1679 = vmatprep.subr.mxu0 0.0
    %1680 = vmatpush1.msra.mxu0 0.0
    %1681 = vmatprep.subr.mxu0 0.0
    %1682 = vmatpush1.msra.mxu0 0.0
    %1683 = vmatprep.subr.mxu0 0.0
    %1684 = vmatpush1.msra.mxu0 0.0
    %1685 = vmatprep.subr.mxu0 0.0
    %1686 = vmatpush1.msra.mxu0 0.0
    %1687 = vmatprep.subr.mxu0 0.0
    %1688 = vmatpush1.msra.mxu0 0.0
    %1689 = vmatprep.subr.mxu0 0.0
    %1690 = vmatpush1.msra.mxu0 0.0
    %1691 = vmatprep.subr.mxu0 0.0
    %1692 = vmatpush1.msra.mxu0 0.0
    %1693 = vmatprep.subr.mxu0 0.0
    %1694 = vmatpush1.msra.mxu0 0.0
    %1695 = vmatprep.subr.mxu0 0.0
    %1696 = vmatpush1.msra.mxu0 0.0
    %1697 = vmatprep.subr.mxu0 0.0
    %1698 = vmatpush1.msra.mxu0 0.0
    %1699 = vmatprep.subr.mxu0 0.0
    %1700 = vmatpush1.msra.mxu0 0.0
    %1701 = vmatprep.subr.mxu0 0.0
    %1702 = vmatpush1.msra.mxu0 0.0
    %1703 = vmatprep.subr.mxu0 0.0
    %1704 = vmatpush1.msra.mxu0 0.0
    %1705 = vmatprep.subr.mxu0 0.0
    %1706 = vmatpush1.msra.mxu0 0.0
    %1707 = vmatprep.subr.mxu0 0.0
    %1708 = vmatpush1.msra.mxu0 0.0
    %1709 = vmatprep.subr.mxu0 0.0
    %1710 = vmatpush1.msra.mxu0 0.0
    %1711 = vmatprep.mubr.f32.mxu0 0.0
    %1712 = vmatmul.mubr.f32.gmra.mrb[0].mxu0 %v1624
    %v1713 = vpop.f32.mrb[0].mxu0
    %v1714 = vadd.f32 %v1585, %v1713
    %v1715 = vpop.f32.mrb[0].mxu0
    %1716 = vmatprep.mubr.f32.mxu0 0.0
    %1717 = vmatmul.mubr.f32.gmra.mrb[0].mxu0 %v1627
    %v1718 = vpop.f32.mrb[0].mxu0
    %v1719 = vadd.f32 %v1590, %v1718
    %v1720 = vpop.f32.mrb[0].mxu0
    %1721 = vmatprep.mubr.f32.mxu0 0.0
    %1722 = vmatmul.mubr.f32.gmra.mrb[0].mxu0 %v1630
    %v1723 = vpop.f32.mrb[0].mxu0
    %v1724 = vadd.f32 %v1595, %v1723
    %v1725 = vpop.f32.mrb[0].mxu0
    %1726 = vmatprep.mubr.f32.mxu0 0.0
    %1727 = vmatmul.mubr.f32.gmra.mrb[0].mxu0 %v1633
    %v1728 = vpop.f32.mrb[0].mxu0
    %v1729 = vadd.f32 %v1600, %v1728
    %v1730 = vpop.f32.mrb[0].mxu0
    %1731 = vmatprep.mubr.f32.mxu0 0.0
    %1732 = vmatmul.mubr.f32.gmra.mrb[0].mxu0 %v1636
    %v1733 = vpop.f32.mrb[0].mxu0
    %v1734 = vadd.f32 %v1605, %v1733
    %v1735 = vpop.f32.mrb[0].mxu0
    %1736 = vmatprep.mubr.f32.mxu0 0.0
    %1737 = vmatmul.mubr.f32.gmra.mrb[0].mxu0 %v1639
    %v1738 = vpop.f32.mrb[0].mxu0
    %v1739 = vadd.f32 %v1610, %v1738
    %v1740 = vpop.f32.mrb[0].mxu0
    %1741 = vmatprep.mubr.f32.mxu0 0.0
    %1742 = vmatmul.mubr.f32.gmra.mrb[0].mxu0 %v1642
    %v1743 = vpop.f32.mrb[0].mxu0
    %v1744 = vadd.f32 %v1615, %v1743
    %v1745 = vpop.f32.mrb[0].mxu0
    %1746 = vmatprep.mubr.f32.mxu0 0.0
    %1747 = vmatmul.mubr.f32.gmra.mrb[0].mxu0 %v1645
    %v1748 = vpop.f32.mrb[0].mxu0
    %v1749 = vadd.f32 %v1620, %v1748
    %v1750 = vpop.f32.mrb[0].mxu0
    %1751 = vdwg.mxu0
    %v1752 = vld [vmem:[%s9] sm:$0x1]
    %v1754 = vlaneseq
    %v1755 = vshrl.u32 %v1754, 7
    %v1756 = vsub.s32 0, %v1755
    %v1757 = vrot.slane %v1752, %v1756
    %v1759 = vadd.f32 %v1714, %v1757
    %v1760 = vadd.f32 %v1719, %v1757
    %v1761 = vadd.f32 %v1724, %v1757
    %v1762 = vadd.f32 %v1729, %v1757
    %v1763 = vadd.f32 %v1734, %v1757
    %v1764 = vadd.f32 %v1739, %v1757
    %v1765 = vadd.f32 %v1744, %v1757
    %v1766 = vadd.f32 %v1749, %v1757
    %1767 = vst [vmem:[#allocation11] sm:$0xff] %v1759
    %1768 = vst [vmem:[#allocation11 + $0x8] sm:$0xff] %v1760
    %1769 = vst [vmem:[#allocation11 + $0x10] sm:$0xff] %v1761
    %1770 = vst [vmem:[#allocation11 + $0x18] sm:$0xff] %v1762
    %1771 = vst [vmem:[#allocation11 + $0x20] sm:$0xff] %v1763
    %1772 = vst [vmem:[#allocation11 + $0x28] sm:$0xff] %v1764
    %1773 = vst [vmem:[#allocation11 + $0x30] sm:$0xff] %v1765
    %1774 = vst [vmem:[#allocation11 + $0x38] sm:$0xff] %v1766
    // Predicated region
    $region54: #{tpu_custom_call.1} parent=1 // pred_check
      _
    $region55: #{tpu_custom_call.1} parent=1 // pred_check_branch
      %1776 = sbr.rel (0) target = $region57
    $region56: #{tpu_custom_call.1} parent=1 // pred_region
      %s1778 = ssub.s32 1024, 1024
      %1779 = vsyncadd [#allocation7], %s1778
      %s1780 = sshll.u32 [#allocation11], 4
      %s1781 = int_to_ptr.vmem [resolvable:$true] %s1780
      %1786 = dma.vmem_to_hbm [thread:$0]  %s1781, 1024, %s10, [#allocation7], 128, 128, 8
    $region57: #{tpu_custom_call.1} parent=1 // pred_fallthru
      _
    // Predicated region
    $region58: #{tpu_custom_call.1} parent=1 // pred_check
      _
    $region59: #{tpu_custom_call.1} parent=1 // pred_check_branch
      %1788 = sbr.rel (0) target = $region61
    $region60: #{tpu_custom_call.1} parent=1 // pred_region
      %1789 = dma.done [#allocation7], 1024
    $region61: #{tpu_custom_call.1} parent=1 // pred_fallthru
      _
    %1790 = vsyncpa [#allocation6], 1
    %1791 = vsyncpa [#allocation9], 1
    %1792 = vsyncpa [#allocation7], 1

</llo_original>
